<compile_context>
chip_gen: v7x
topology: tpu7x:2x2x1
jax: 0.10.0
libtpu: 0.0.40
codegen_flags: <defaults>
</compile_context>

<pallas_src>
import jax
import jax.numpy as jnp
from jax.experimental import pallas as pl
from jax.experimental.pallas import tpu as pltpu

EMBED_DIM = 50
HIDDEN = 32
VOCAB = 10000
LANE = 128  # lane-dense padded width for the classifier output


def lstm_net_kernel(x_ref,                      # (S*B, E)   timestep-major embeddings
                    wih1_ref,                   # (E, 4H)    layer-1 input weights  [i|f|o|g]
                    whh1_ref,                   # (H, 4H)    layer-1 hidden weights [i|f|o|g]
                    b1_ref,                     # (1, 4H)    fused b_ih+b_hh, layer 1
                    w2_ref,                     # (2H, 4H)   fused [w_ih2; w_hh2]   [i|f|o|g]
                    b2_ref,                     # (1, 4H)    fused b_ih+b_hh, layer 2
                    wlin_ref,                   # (H, 128)   zero-padded classifier weight
                    blin_ref,                   # (1, 128)   zero-padded classifier bias
                    out_ref):                   # (B, 128)   lane-dense padded logits
    SB, _ = x_ref.shape
    B, _ = out_ref.shape
    S = SB // B
    H = HIDDEN

    # --- hoisted layer-1 input projection: one batched matmul over all timesteps.
    gx1 = jnp.dot(x_ref[...], wih1_ref[...],
                  preferred_element_type=jnp.float32) + b1_ref[...]   # (S*B, 4H)

    whh1 = whh1_ref[...]
    w2 = w2_ref[...]
    b2 = b2_ref[...]

    def act(gates):
        # gate column order is [i | f | o | g]: one sigmoid over (B, 3H), one tanh over (B, H)
        s = jax.nn.sigmoid(gates[:, :3 * H])
        g = jnp.tanh(gates[:, 3 * H:])
        return s[:, :H], s[:, H:2 * H], s[:, 2 * H:], g

    h1 = c1 = h2 = c2 = jnp.zeros((B, H), jnp.float32)

    # S=8: fully unrolled straight-line recurrence with static slices (for long S,
    # switch to lax.fori_loop(..., unroll=k)).
    for t in range(S):
        # layer 1: precomputed x-projection slice + hh matmul
        g1 = gx1[t * B:(t + 1) * B, :] + jnp.dot(
            h1, whh1, preferred_element_type=jnp.float32)
        i1, f1, o1, gg1 = act(g1)
        c1 = f1 * c1 + i1 * gg1
        h1 = o1 * jnp.tanh(c1)

        # layer 2: single fused matmul against [w_ih2; w_hh2]
        g2 = jnp.dot(jnp.concatenate([h1, h2], axis=1), w2,
                     preferred_element_type=jnp.float32) + b2
        i2, f2, o2, gg2 = act(g2)
        c2 = f2 * c2 + i2 * gg2
        h2 = o2 * jnp.tanh(c2)

    # final linear on the last hidden state, lane-dense (padded) output
    out_ref[...] = jnp.dot(h2, wlin_ref[...],
                           preferred_element_type=jnp.float32) + blin_ref[...]


def pack_params(params):
    """One-time weight re-layout: gate permutation [i|f|g|o]->[i|f|o|g], layer-2
    ih/hh fusion, and lane-dense padding of the classifier."""
    H = HIDDEN
    C = params["w_lin"].shape[1]
    perm = jnp.concatenate([jnp.arange(0, H), jnp.arange(H, 2 * H),
                            jnp.arange(3 * H, 4 * H), jnp.arange(2 * H, 3 * H)])
    packed = {
        "embedding": params["embedding"],
        "w_ih1": params["w_ih1"][:, perm],
        "w_hh1": params["w_hh1"][:, perm],
        "b1": params["b1"][:, perm],
        "w2": jnp.concatenate([params["w_ih2"], params["w_hh2"]], axis=0)[:, perm],
        "b2": params["b2"][:, perm],
        "w_lin": jnp.zeros((H, LANE), jnp.float32).at[:, :C].set(params["w_lin"]),
        "b_lin": jnp.zeros((1, LANE), jnp.float32).at[:, :C].set(params["b_lin"]),
    }
    return packed


def net_forward(tokens, packed, num_classes):
    B, S = tokens.shape

    # Embedding gather directly in timestep-major (S, B) flattened order:
    # row t*B + b  — no (B,S,E)->(S,B,E) transpose materialization.
    x2d = packed["embedding"][tokens.T.reshape(-1)]          # (S*B, E) float32

    vmem = pl.BlockSpec(memory_space=pltpu.MemorySpace.VMEM)
    out_padded = pl.pallas_call(
        lstm_net_kernel,
        out_shape=jax.ShapeDtypeStruct((B, LANE), jnp.float32),
        in_specs=[vmem] * 8,
        out_specs=vmem,
    )(x2d,
      packed["w_ih1"], packed["w_hh1"], packed["b1"],
      packed["w2"], packed["b2"],
      packed["w_lin"], packed["b_lin"])
    return out_padded[:, :num_classes]


def init_params(num_classes, key):
    ks = jax.random.split(key, 12)
    k = 1.0 / jnp.sqrt(HIDDEN)
    u = lambda kk, shape: jax.random.uniform(kk, shape, jnp.float32, -k, k)
    params = {
        "embedding": jax.random.normal(ks[0], (VOCAB, EMBED_DIM), jnp.float32),
        # LSTM layer 1 (input = EMBED_DIM), PyTorch gate order [i|f|g|o], weights transposed
        "w_ih1": u(ks[1], (EMBED_DIM, 4 * HIDDEN)),
        "w_hh1": u(ks[2], (HIDDEN, 4 * HIDDEN)),
        "b1": (u(ks[3], (1, 4 * HIDDEN)) + u(ks[4], (1, 4 * HIDDEN))),  # b_ih + b_hh
        # LSTM layer 2 (input = HIDDEN)
        "w_ih2": u(ks[5], (HIDDEN, 4 * HIDDEN)),
        "w_hh2": u(ks[6], (HIDDEN, 4 * HIDDEN)),
        "b2": (u(ks[7], (1, 4 * HIDDEN)) + u(ks[8], (1, 4 * HIDDEN))),
        # Final linear
        "w_lin": u(ks[9], (HIDDEN, num_classes)),
        "b_lin": u(ks[10], (1, num_classes)),
    }
    return params


def reference_forward(tokens, params):
    """Pure-JAX reference matching PyTorch LSTM semantics (gate order i,f,g,o)."""
    emb = params["embedding"][tokens]            # (B, S, E)
    B, S, _ = emb.shape

    def cell(x_in, h, c, wih, whh, b):
        gates = x_in @ wih + h @ whh + b
        i, f, g, o = jnp.split(gates, 4, axis=-1)
        c_new = jax.nn.sigmoid(f) * c + jax.nn.sigmoid(i) * jnp.tanh(g)
        h_new = jax.nn.sigmoid(o) * jnp.tanh(c_new)
        return h_new, c_new

    h1 = c1 = h2 = c2 = jnp.zeros((B, HIDDEN), jnp.float32)
    for t in range(S):
        x_t = emb[:, t, :]
        h1, c1 = cell(x_t, h1, c1, params["w_ih1"], params["w_hh1"], params["b1"])
        h2, c2 = cell(h1, h2, c2, params["w_ih2"], params["w_hh2"], params["b2"])
    return h2 @ params["w_lin"] + params["b_lin"]


if __name__ == "__main__":
    B, S, NUM_CLASSES = 2, 8, 5
    key = jax.random.PRNGKey(0)
    k_tok, k_par = jax.random.split(key)

    tokens = jax.random.randint(k_tok, (B, S), 0, VOCAB, dtype=jnp.int32)
    params = init_params(NUM_CLASSES, k_par)
    packed = pack_params(params)          # one-time weight re-layout

    out = net_forward(tokens, packed, NUM_CLASSES)
    out = jax.block_until_ready(out)

    ref = reference_forward(tokens, params)
    assert out.shape == (B, NUM_CLASSES)
    assert jnp.allclose(out, ref, rtol=1e-4, atol=1e-4), "mismatch vs reference"

    print("KERNEL_OK")
</pallas_src>

<mosaic_0001>
module attributes {stable_mosaic.version = 11 : i64} {
  func.func @lstm_net_kernel(%arg0: memref<16x50xf32, #tpu.memory_space<vmem>>, %arg1: memref<50x128xf32, #tpu.memory_space<vmem>>, %arg2: memref<32x128xf32, #tpu.memory_space<vmem>>, %arg3: memref<1x128xf32, #tpu.memory_space<vmem>>, %arg4: memref<64x128xf32, #tpu.memory_space<vmem>>, %arg5: memref<1x128xf32, #tpu.memory_space<vmem>>, %arg6: memref<32x128xf32, #tpu.memory_space<vmem>>, %arg7: memref<1x128xf32, #tpu.memory_space<vmem>>, %arg8: memref<2x128xf32, #tpu.memory_space<vmem>>) attributes {dimension_semantics = [], scalar_prefetch = 0 : i64, scratch_operands = 0 : i64, tpu.core_type = #tpu.core_type<tc>} {
    %c0 = arith.constant 0 : index
    %c0_0 = arith.constant 0 : index
    %0 = vector.load %arg0[%c0, %c0_0] : memref<16x50xf32, #tpu.memory_space<vmem>>, vector<16x50xf32>
    %c0_1 = arith.constant 0 : index
    %c0_2 = arith.constant 0 : index
    %1 = vector.load %arg1[%c0_1, %c0_2] : memref<50x128xf32, #tpu.memory_space<vmem>>, vector<50x128xf32>
    %cst = arith.constant dense<0.000000e+00> : vector<16x128xf32>
    %2 = tpu.matmul %0, %1, %cst {dimension_numbers = #tpu.dot_dimension_numbers<[1], [0], [0], [1], [0, 0, 1, 1], [], []>} : vector<16x50xf32>, vector<50x128xf32>, vector<16x128xf32> -> vector<16x128xf32>
    %c0_3 = arith.constant 0 : index
    %c0_4 = arith.constant 0 : index
    %3 = vector.load %arg3[%c0_3, %c0_4] : memref<1x128xf32, #tpu.memory_space<vmem>>, vector<1x128xf32>
    %4 = vector.broadcast %3 : vector<1x128xf32> to vector<16x128xf32>
    %5 = arith.addf %2, %4 : vector<16x128xf32>
    %c0_5 = arith.constant 0 : index
    %c0_6 = arith.constant 0 : index
    %6 = vector.load %arg2[%c0_5, %c0_6] : memref<32x128xf32, #tpu.memory_space<vmem>>, vector<32x128xf32>
    %c0_7 = arith.constant 0 : index
    %c0_8 = arith.constant 0 : index
    %7 = vector.load %arg4[%c0_7, %c0_8] : memref<64x128xf32, #tpu.memory_space<vmem>>, vector<64x128xf32>
    %c0_9 = arith.constant 0 : index
    %c0_10 = arith.constant 0 : index
    %8 = vector.load %arg5[%c0_9, %c0_10] : memref<1x128xf32, #tpu.memory_space<vmem>>, vector<1x128xf32>
    %cst_11 = arith.constant 0.000000e+00 : f32
    %9 = vector.broadcast %cst_11 : f32 to vector<2x32xf32>
    %10 = vector.extract_strided_slice %5 {offsets = [0, 0], sizes = [2, 128], strides = [1, 1]} : vector<16x128xf32> to vector<2x128xf32>
    %cst_12 = arith.constant dense<0.000000e+00> : vector<2x128xf32>
    %11 = tpu.matmul %9, %6, %cst_12 {dimension_numbers = #tpu.dot_dimension_numbers<[1], [0], [0], [1], [0, 0, 1, 1], [], []>} : vector<2x32xf32>, vector<32x128xf32>, vector<2x128xf32> -> vector<2x128xf32>
    %12 = arith.addf %10, %11 : vector<2x128xf32>
    %13 = vector.extract_strided_slice %12 {offsets = [0, 0], sizes = [2, 96], strides = [1, 1]} : vector<2x128xf32> to vector<2x96xf32>
    %14 = arith.negf %13 : vector<2x96xf32>
    %15 = math.exp %14 : vector<2x96xf32>
    %cst_13 = arith.constant 1.000000e+00 : f32
    %16 = vector.broadcast %cst_13 : f32 to vector<2x96xf32>
    %17 = arith.addf %16, %15 : vector<2x96xf32>
    %18 = arith.divf %16, %17 : vector<2x96xf32>
    %19 = vector.extract_strided_slice %12 {offsets = [0, 96], sizes = [2, 32], strides = [1, 1]} : vector<2x128xf32> to vector<2x32xf32>
    %20 = math.tanh %19 : vector<2x32xf32>
    %21 = vector.extract_strided_slice %18 {offsets = [0, 0], sizes = [2, 32], strides = [1, 1]} : vector<2x96xf32> to vector<2x32xf32>
    %22 = vector.extract_strided_slice %18 {offsets = [0, 32], sizes = [2, 32], strides = [1, 1]} : vector<2x96xf32> to vector<2x32xf32>
    %23 = vector.extract_strided_slice %18 {offsets = [0, 64], sizes = [2, 32], strides = [1, 1]} : vector<2x96xf32> to vector<2x32xf32>
    %24 = arith.mulf %22, %9 : vector<2x32xf32>
    %25 = arith.mulf %21, %20 : vector<2x32xf32>
    %26 = arith.addf %24, %25 : vector<2x32xf32>
    %27 = math.tanh %26 : vector<2x32xf32>
    %28 = arith.mulf %23, %27 : vector<2x32xf32>
    %29 = tpu.concatenate %28, %9 in 1 : vector<2x32xf32>, vector<2x32xf32> -> vector<2x64xf32>
    %cst_14 = arith.constant dense<0.000000e+00> : vector<2x128xf32>
    %30 = tpu.matmul %29, %7, %cst_14 {dimension_numbers = #tpu.dot_dimension_numbers<[1], [0], [0], [1], [0, 0, 1, 1], [], []>} : vector<2x64xf32>, vector<64x128xf32>, vector<2x128xf32> -> vector<2x128xf32>
    %31 = vector.broadcast %8 : vector<1x128xf32> to vector<2x128xf32>
    %32 = arith.addf %30, %31 : vector<2x128xf32>
    %33 = vector.extract_strided_slice %32 {offsets = [0, 0], sizes = [2, 96], strides = [1, 1]} : vector<2x128xf32> to vector<2x96xf32>
    %34 = arith.negf %33 : vector<2x96xf32>
    %35 = math.exp %34 : vector<2x96xf32>
    %cst_15 = arith.constant 1.000000e+00 : f32
    %36 = vector.broadcast %cst_15 : f32 to vector<2x96xf32>
    %37 = arith.addf %36, %35 : vector<2x96xf32>
    %38 = arith.divf %36, %37 : vector<2x96xf32>
    %39 = vector.extract_strided_slice %32 {offsets = [0, 96], sizes = [2, 32], strides = [1, 1]} : vector<2x128xf32> to vector<2x32xf32>
    %40 = math.tanh %39 : vector<2x32xf32>
    %41 = vector.extract_strided_slice %38 {offsets = [0, 0], sizes = [2, 32], strides = [1, 1]} : vector<2x96xf32> to vector<2x32xf32>
    %42 = vector.extract_strided_slice %38 {offsets = [0, 32], sizes = [2, 32], strides = [1, 1]} : vector<2x96xf32> to vector<2x32xf32>
    %43 = vector.extract_strided_slice %38 {offsets = [0, 64], sizes = [2, 32], strides = [1, 1]} : vector<2x96xf32> to vector<2x32xf32>
    %44 = arith.mulf %42, %9 : vector<2x32xf32>
    %45 = arith.mulf %41, %40 : vector<2x32xf32>
    %46 = arith.addf %44, %45 : vector<2x32xf32>
    %47 = math.tanh %46 : vector<2x32xf32>
    %48 = arith.mulf %43, %47 : vector<2x32xf32>
    %49 = vector.extract_strided_slice %5 {offsets = [2, 0], sizes = [2, 128], strides = [1, 1]} : vector<16x128xf32> to vector<2x128xf32>
    %cst_16 = arith.constant dense<0.000000e+00> : vector<2x128xf32>
    %50 = tpu.matmul %28, %6, %cst_16 {dimension_numbers = #tpu.dot_dimension_numbers<[1], [0], [0], [1], [0, 0, 1, 1], [], []>} : vector<2x32xf32>, vector<32x128xf32>, vector<2x128xf32> -> vector<2x128xf32>
    %51 = arith.addf %49, %50 : vector<2x128xf32>
    %52 = vector.extract_strided_slice %51 {offsets = [0, 0], sizes = [2, 96], strides = [1, 1]} : vector<2x128xf32> to vector<2x96xf32>
    %53 = arith.negf %52 : vector<2x96xf32>
    %54 = math.exp %53 : vector<2x96xf32>
    %cst_17 = arith.constant 1.000000e+00 : f32
    %55 = vector.broadcast %cst_17 : f32 to vector<2x96xf32>
    %56 = arith.addf %55, %54 : vector<2x96xf32>
    %57 = arith.divf %55, %56 : vector<2x96xf32>
    %58 = vector.extract_strided_slice %51 {offsets = [0, 96], sizes = [2, 32], strides = [1, 1]} : vector<2x128xf32> to vector<2x32xf32>
    %59 = math.tanh %58 : vector<2x32xf32>
    %60 = vector.extract_strided_slice %57 {offsets = [0, 0], sizes = [2, 32], strides = [1, 1]} : vector<2x96xf32> to vector<2x32xf32>
    %61 = vector.extract_strided_slice %57 {offsets = [0, 32], sizes = [2, 32], strides = [1, 1]} : vector<2x96xf32> to vector<2x32xf32>
    %62 = vector.extract_strided_slice %57 {offsets = [0, 64], sizes = [2, 32], strides = [1, 1]} : vector<2x96xf32> to vector<2x32xf32>
    %63 = arith.mulf %61, %26 : vector<2x32xf32>
    %64 = arith.mulf %60, %59 : vector<2x32xf32>
    %65 = arith.addf %63, %64 : vector<2x32xf32>
    %66 = math.tanh %65 : vector<2x32xf32>
    %67 = arith.mulf %62, %66 : vector<2x32xf32>
    %68 = tpu.concatenate %67, %48 in 1 : vector<2x32xf32>, vector<2x32xf32> -> vector<2x64xf32>
    %cst_18 = arith.constant dense<0.000000e+00> : vector<2x128xf32>
    %69 = tpu.matmul %68, %7, %cst_18 {dimension_numbers = #tpu.dot_dimension_numbers<[1], [0], [0], [1], [0, 0, 1, 1], [], []>} : vector<2x64xf32>, vector<64x128xf32>, vector<2x128xf32> -> vector<2x128xf32>
    %70 = vector.broadcast %8 : vector<1x128xf32> to vector<2x128xf32>
    %71 = arith.addf %69, %70 : vector<2x128xf32>
    %72 = vector.extract_strided_slice %71 {offsets = [0, 0], sizes = [2, 96], strides = [1, 1]} : vector<2x128xf32> to vector<2x96xf32>
    %73 = arith.negf %72 : vector<2x96xf32>
    %74 = math.exp %73 : vector<2x96xf32>
    %cst_19 = arith.constant 1.000000e+00 : f32
    %75 = vector.broadcast %cst_19 : f32 to vector<2x96xf32>
    %76 = arith.addf %75, %74 : vector<2x96xf32>
    %77 = arith.divf %75, %76 : vector<2x96xf32>
    %78 = vector.extract_strided_slice %71 {offsets = [0, 96], sizes = [2, 32], strides = [1, 1]} : vector<2x128xf32> to vector<2x32xf32>
    %79 = math.tanh %78 : vector<2x32xf32>
    %80 = vector.extract_strided_slice %77 {offsets = [0, 0], sizes = [2, 32], strides = [1, 1]} : vector<2x96xf32> to vector<2x32xf32>
    %81 = vector.extract_strided_slice %77 {offsets = [0, 32], sizes = [2, 32], strides = [1, 1]} : vector<2x96xf32> to vector<2x32xf32>
    %82 = vector.extract_strided_slice %77 {offsets = [0, 64], sizes = [2, 32], strides = [1, 1]} : vector<2x96xf32> to vector<2x32xf32>
    %83 = arith.mulf %81, %46 : vector<2x32xf32>
    %84 = arith.mulf %80, %79 : vector<2x32xf32>
    %85 = arith.addf %83, %84 : vector<2x32xf32>
    %86 = math.tanh %85 : vector<2x32xf32>
    %87 = arith.mulf %82, %86 : vector<2x32xf32>
    %88 = vector.extract_strided_slice %5 {offsets = [4, 0], sizes = [2, 128], strides = [1, 1]} : vector<16x128xf32> to vector<2x128xf32>
    %cst_20 = arith.constant dense<0.000000e+00> : vector<2x128xf32>
    %89 = tpu.matmul %67, %6, %cst_20 {dimension_numbers = #tpu.dot_dimension_numbers<[1], [0], [0], [1], [0, 0, 1, 1], [], []>} : vector<2x32xf32>, vector<32x128xf32>, vector<2x128xf32> -> vector<2x128xf32>
    %90 = arith.addf %88, %89 : vector<2x128xf32>
    %91 = vector.extract_strided_slice %90 {offsets = [0, 0], sizes = [2, 96], strides = [1, 1]} : vector<2x128xf32> to vector<2x96xf32>
    %92 = arith.negf %91 : vector<2x96xf32>
    %93 = math.exp %92 : vector<2x96xf32>
    %cst_21 = arith.constant 1.000000e+00 : f32
    %94 = vector.broadcast %cst_21 : f32 to vector<2x96xf32>
    %95 = arith.addf %94, %93 : vector<2x96xf32>
    %96 = arith.divf %94, %95 : vector<2x96xf32>
    %97 = vector.extract_strided_slice %90 {offsets = [0, 96], sizes = [2, 32], strides = [1, 1]} : vector<2x128xf32> to vector<2x32xf32>
    %98 = math.tanh %97 : vector<2x32xf32>
    %99 = vector.extract_strided_slice %96 {offsets = [0, 0], sizes = [2, 32], strides = [1, 1]} : vector<2x96xf32> to vector<2x32xf32>
    %100 = vector.extract_strided_slice %96 {offsets = [0, 32], sizes = [2, 32], strides = [1, 1]} : vector<2x96xf32> to vector<2x32xf32>
    %101 = vector.extract_strided_slice %96 {offsets = [0, 64], sizes = [2, 32], strides = [1, 1]} : vector<2x96xf32> to vector<2x32xf32>
    %102 = arith.mulf %100, %65 : vector<2x32xf32>
    %103 = arith.mulf %99, %98 : vector<2x32xf32>
    %104 = arith.addf %102, %103 : vector<2x32xf32>
    %105 = math.tanh %104 : vector<2x32xf32>
    %106 = arith.mulf %101, %105 : vector<2x32xf32>
    %107 = tpu.concatenate %106, %87 in 1 : vector<2x32xf32>, vector<2x32xf32> -> vector<2x64xf32>
    %cst_22 = arith.constant dense<0.000000e+00> : vector<2x128xf32>
    %108 = tpu.matmul %107, %7, %cst_22 {dimension_numbers = #tpu.dot_dimension_numbers<[1], [0], [0], [1], [0, 0, 1, 1], [], []>} : vector<2x64xf32>, vector<64x128xf32>, vector<2x128xf32> -> vector<2x128xf32>
    %109 = vector.broadcast %8 : vector<1x128xf32> to vector<2x128xf32>
    %110 = arith.addf %108, %109 : vector<2x128xf32>
    %111 = vector.extract_strided_slice %110 {offsets = [0, 0], sizes = [2, 96], strides = [1, 1]} : vector<2x128xf32> to vector<2x96xf32>
    %112 = arith.negf %111 : vector<2x96xf32>
    %113 = math.exp %112 : vector<2x96xf32>
    %cst_23 = arith.constant 1.000000e+00 : f32
    %114 = vector.broadcast %cst_23 : f32 to vector<2x96xf32>
    %115 = arith.addf %114, %113 : vector<2x96xf32>
    %116 = arith.divf %114, %115 : vector<2x96xf32>
    %117 = vector.extract_strided_slice %110 {offsets = [0, 96], sizes = [2, 32], strides = [1, 1]} : vector<2x128xf32> to vector<2x32xf32>
    %118 = math.tanh %117 : vector<2x32xf32>
    %119 = vector.extract_strided_slice %116 {offsets = [0, 0], sizes = [2, 32], strides = [1, 1]} : vector<2x96xf32> to vector<2x32xf32>
    %120 = vector.extract_strided_slice %116 {offsets = [0, 32], sizes = [2, 32], strides = [1, 1]} : vector<2x96xf32> to vector<2x32xf32>
    %121 = vector.extract_strided_slice %116 {offsets = [0, 64], sizes = [2, 32], strides = [1, 1]} : vector<2x96xf32> to vector<2x32xf32>
    %122 = arith.mulf %120, %85 : vector<2x32xf32>
    %123 = arith.mulf %119, %118 : vector<2x32xf32>
    %124 = arith.addf %122, %123 : vector<2x32xf32>
    %125 = math.tanh %124 : vector<2x32xf32>
    %126 = arith.mulf %121, %125 : vector<2x32xf32>
    %127 = vector.extract_strided_slice %5 {offsets = [6, 0], sizes = [2, 128], strides = [1, 1]} : vector<16x128xf32> to vector<2x128xf32>
    %cst_24 = arith.constant dense<0.000000e+00> : vector<2x128xf32>
    %128 = tpu.matmul %106, %6, %cst_24 {dimension_numbers = #tpu.dot_dimension_numbers<[1], [0], [0], [1], [0, 0, 1, 1], [], []>} : vector<2x32xf32>, vector<32x128xf32>, vector<2x128xf32> -> vector<2x128xf32>
    %129 = arith.addf %127, %128 : vector<2x128xf32>
    %130 = vector.extract_strided_slice %129 {offsets = [0, 0], sizes = [2, 96], strides = [1, 1]} : vector<2x128xf32> to vector<2x96xf32>
    %131 = arith.negf %130 : vector<2x96xf32>
    %132 = math.exp %131 : vector<2x96xf32>
    %cst_25 = arith.constant 1.000000e+00 : f32
    %133 = vector.broadcast %cst_25 : f32 to vector<2x96xf32>
    %134 = arith.addf %133, %132 : vector<2x96xf32>
    %135 = arith.divf %133, %134 : vector<2x96xf32>
    %136 = vector.extract_strided_slice %129 {offsets = [0, 96], sizes = [2, 32], strides = [1, 1]} : vector<2x128xf32> to vector<2x32xf32>
    %137 = math.tanh %136 : vector<2x32xf32>
    %138 = vector.extract_strided_slice %135 {offsets = [0, 0], sizes = [2, 32], strides = [1, 1]} : vector<2x96xf32> to vector<2x32xf32>
    %139 = vector.extract_strided_slice %135 {offsets = [0, 32], sizes = [2, 32], strides = [1, 1]} : vector<2x96xf32> to vector<2x32xf32>
    %140 = vector.extract_strided_slice %135 {offsets = [0, 64], sizes = [2, 32], strides = [1, 1]} : vector<2x96xf32> to vector<2x32xf32>
    %141 = arith.mulf %139, %104 : vector<2x32xf32>
    %142 = arith.mulf %138, %137 : vector<2x32xf32>
    %143 = arith.addf %141, %142 : vector<2x32xf32>
    %144 = math.tanh %143 : vector<2x32xf32>
    %145 = arith.mulf %140, %144 : vector<2x32xf32>
    %146 = tpu.concatenate %145, %126 in 1 : vector<2x32xf32>, vector<2x32xf32> -> vector<2x64xf32>
    %cst_26 = arith.constant dense<0.000000e+00> : vector<2x128xf32>
    %147 = tpu.matmul %146, %7, %cst_26 {dimension_numbers = #tpu.dot_dimension_numbers<[1], [0], [0], [1], [0, 0, 1, 1], [], []>} : vector<2x64xf32>, vector<64x128xf32>, vector<2x128xf32> -> vector<2x128xf32>
    %148 = vector.broadcast %8 : vector<1x128xf32> to vector<2x128xf32>
    %149 = arith.addf %147, %148 : vector<2x128xf32>
    %150 = vector.extract_strided_slice %149 {offsets = [0, 0], sizes = [2, 96], strides = [1, 1]} : vector<2x128xf32> to vector<2x96xf32>
    %151 = arith.negf %150 : vector<2x96xf32>
    %152 = math.exp %151 : vector<2x96xf32>
    %cst_27 = arith.constant 1.000000e+00 : f32
    %153 = vector.broadcast %cst_27 : f32 to vector<2x96xf32>
    %154 = arith.addf %153, %152 : vector<2x96xf32>
    %155 = arith.divf %153, %154 : vector<2x96xf32>
    %156 = vector.extract_strided_slice %149 {offsets = [0, 96], sizes = [2, 32], strides = [1, 1]} : vector<2x128xf32> to vector<2x32xf32>
    %157 = math.tanh %156 : vector<2x32xf32>
    %158 = vector.extract_strided_slice %155 {offsets = [0, 0], sizes = [2, 32], strides = [1, 1]} : vector<2x96xf32> to vector<2x32xf32>
    %159 = vector.extract_strided_slice %155 {offsets = [0, 32], sizes = [2, 32], strides = [1, 1]} : vector<2x96xf32> to vector<2x32xf32>
    %160 = vector.extract_strided_slice %155 {offsets = [0, 64], sizes = [2, 32], strides = [1, 1]} : vector<2x96xf32> to vector<2x32xf32>
    %161 = arith.mulf %159, %124 : vector<2x32xf32>
    %162 = arith.mulf %158, %157 : vector<2x32xf32>
    %163 = arith.addf %161, %162 : vector<2x32xf32>
    %164 = math.tanh %163 : vector<2x32xf32>
    %165 = arith.mulf %160, %164 : vector<2x32xf32>
    %166 = vector.extract_strided_slice %5 {offsets = [8, 0], sizes = [2, 128], strides = [1, 1]} : vector<16x128xf32> to vector<2x128xf32>
    %cst_28 = arith.constant dense<0.000000e+00> : vector<2x128xf32>
    %167 = tpu.matmul %145, %6, %cst_28 {dimension_numbers = #tpu.dot_dimension_numbers<[1], [0], [0], [1], [0, 0, 1, 1], [], []>} : vector<2x32xf32>, vector<32x128xf32>, vector<2x128xf32> -> vector<2x128xf32>
    %168 = arith.addf %166, %167 : vector<2x128xf32>
    %169 = vector.extract_strided_slice %168 {offsets = [0, 0], sizes = [2, 96], strides = [1, 1]} : vector<2x128xf32> to vector<2x96xf32>
    %170 = arith.negf %169 : vector<2x96xf32>
    %171 = math.exp %170 : vector<2x96xf32>
    %cst_29 = arith.constant 1.000000e+00 : f32
    %172 = vector.broadcast %cst_29 : f32 to vector<2x96xf32>
    %173 = arith.addf %172, %171 : vector<2x96xf32>
    %174 = arith.divf %172, %173 : vector<2x96xf32>
    %175 = vector.extract_strided_slice %168 {offsets = [0, 96], sizes = [2, 32], strides = [1, 1]} : vector<2x128xf32> to vector<2x32xf32>
    %176 = math.tanh %175 : vector<2x32xf32>
    %177 = vector.extract_strided_slice %174 {offsets = [0, 0], sizes = [2, 32], strides = [1, 1]} : vector<2x96xf32> to vector<2x32xf32>
    %178 = vector.extract_strided_slice %174 {offsets = [0, 32], sizes = [2, 32], strides = [1, 1]} : vector<2x96xf32> to vector<2x32xf32>
    %179 = vector.extract_strided_slice %174 {offsets = [0, 64], sizes = [2, 32], strides = [1, 1]} : vector<2x96xf32> to vector<2x32xf32>
    %180 = arith.mulf %178, %143 : vector<2x32xf32>
    %181 = arith.mulf %177, %176 : vector<2x32xf32>
    %182 = arith.addf %180, %181 : vector<2x32xf32>
    %183 = math.tanh %182 : vector<2x32xf32>
    %184 = arith.mulf %179, %183 : vector<2x32xf32>
    %185 = tpu.concatenate %184, %165 in 1 : vector<2x32xf32>, vector<2x32xf32> -> vector<2x64xf32>
    %cst_30 = arith.constant dense<0.000000e+00> : vector<2x128xf32>
    %186 = tpu.matmul %185, %7, %cst_30 {dimension_numbers = #tpu.dot_dimension_numbers<[1], [0], [0], [1], [0, 0, 1, 1], [], []>} : vector<2x64xf32>, vector<64x128xf32>, vector<2x128xf32> -> vector<2x128xf32>
    %187 = vector.broadcast %8 : vector<1x128xf32> to vector<2x128xf32>
    %188 = arith.addf %186, %187 : vector<2x128xf32>
    %189 = vector.extract_strided_slice %188 {offsets = [0, 0], sizes = [2, 96], strides = [1, 1]} : vector<2x128xf32> to vector<2x96xf32>
    %190 = arith.negf %189 : vector<2x96xf32>
    %191 = math.exp %190 : vector<2x96xf32>
    %cst_31 = arith.constant 1.000000e+00 : f32
    %192 = vector.broadcast %cst_31 : f32 to vector<2x96xf32>
    %193 = arith.addf %192, %191 : vector<2x96xf32>
    %194 = arith.divf %192, %193 : vector<2x96xf32>
    %195 = vector.extract_strided_slice %188 {offsets = [0, 96], sizes = [2, 32], strides = [1, 1]} : vector<2x128xf32> to vector<2x32xf32>
    %196 = math.tanh %195 : vector<2x32xf32>
    %197 = vector.extract_strided_slice %194 {offsets = [0, 0], sizes = [2, 32], strides = [1, 1]} : vector<2x96xf32> to vector<2x32xf32>
    %198 = vector.extract_strided_slice %194 {offsets = [0, 32], sizes = [2, 32], strides = [1, 1]} : vector<2x96xf32> to vector<2x32xf32>
    %199 = vector.extract_strided_slice %194 {offsets = [0, 64], sizes = [2, 32], strides = [1, 1]} : vector<2x96xf32> to vector<2x32xf32>
    %200 = arith.mulf %198, %163 : vector<2x32xf32>
    %201 = arith.mulf %197, %196 : vector<2x32xf32>
    %202 = arith.addf %200, %201 : vector<2x32xf32>
    %203 = math.tanh %202 : vector<2x32xf32>
    %204 = arith.mulf %199, %203 : vector<2x32xf32>
    %205 = vector.extract_strided_slice %5 {offsets = [10, 0], sizes = [2, 128], strides = [1, 1]} : vector<16x128xf32> to vector<2x128xf32>
    %cst_32 = arith.constant dense<0.000000e+00> : vector<2x128xf32>
    %206 = tpu.matmul %184, %6, %cst_32 {dimension_numbers = #tpu.dot_dimension_numbers<[1], [0], [0], [1], [0, 0, 1, 1], [], []>} : vector<2x32xf32>, vector<32x128xf32>, vector<2x128xf32> -> vector<2x128xf32>
    %207 = arith.addf %205, %206 : vector<2x128xf32>
    %208 = vector.extract_strided_slice %207 {offsets = [0, 0], sizes = [2, 96], strides = [1, 1]} : vector<2x128xf32> to vector<2x96xf32>
    %209 = arith.negf %208 : vector<2x96xf32>
    %210 = math.exp %209 : vector<2x96xf32>
    %cst_33 = arith.constant 1.000000e+00 : f32
    %211 = vector.broadcast %cst_33 : f32 to vector<2x96xf32>
    %212 = arith.addf %211, %210 : vector<2x96xf32>
    %213 = arith.divf %211, %212 : vector<2x96xf32>
    %214 = vector.extract_strided_slice %207 {offsets = [0, 96], sizes = [2, 32], strides = [1, 1]} : vector<2x128xf32> to vector<2x32xf32>
    %215 = math.tanh %214 : vector<2x32xf32>
    %216 = vector.extract_strided_slice %213 {offsets = [0, 0], sizes = [2, 32], strides = [1, 1]} : vector<2x96xf32> to vector<2x32xf32>
    %217 = vector.extract_strided_slice %213 {offsets = [0, 32], sizes = [2, 32], strides = [1, 1]} : vector<2x96xf32> to vector<2x32xf32>
    %218 = vector.extract_strided_slice %213 {offsets = [0, 64], sizes = [2, 32], strides = [1, 1]} : vector<2x96xf32> to vector<2x32xf32>
    %219 = arith.mulf %217, %182 : vector<2x32xf32>
    %220 = arith.mulf %216, %215 : vector<2x32xf32>
    %221 = arith.addf %219, %220 : vector<2x32xf32>
    %222 = math.tanh %221 : vector<2x32xf32>
    %223 = arith.mulf %218, %222 : vector<2x32xf32>
    %224 = tpu.concatenate %223, %204 in 1 : vector<2x32xf32>, vector<2x32xf32> -> vector<2x64xf32>
    %cst_34 = arith.constant dense<0.000000e+00> : vector<2x128xf32>
    %225 = tpu.matmul %224, %7, %cst_34 {dimension_numbers = #tpu.dot_dimension_numbers<[1], [0], [0], [1], [0, 0, 1, 1], [], []>} : vector<2x64xf32>, vector<64x128xf32>, vector<2x128xf32> -> vector<2x128xf32>
    %226 = vector.broadcast %8 : vector<1x128xf32> to vector<2x128xf32>
    %227 = arith.addf %225, %226 : vector<2x128xf32>
    %228 = vector.extract_strided_slice %227 {offsets = [0, 0], sizes = [2, 96], strides = [1, 1]} : vector<2x128xf32> to vector<2x96xf32>
    %229 = arith.negf %228 : vector<2x96xf32>
    %230 = math.exp %229 : vector<2x96xf32>
    %cst_35 = arith.constant 1.000000e+00 : f32
    %231 = vector.broadcast %cst_35 : f32 to vector<2x96xf32>
    %232 = arith.addf %231, %230 : vector<2x96xf32>
    %233 = arith.divf %231, %232 : vector<2x96xf32>
    %234 = vector.extract_strided_slice %227 {offsets = [0, 96], sizes = [2, 32], strides = [1, 1]} : vector<2x128xf32> to vector<2x32xf32>
    %235 = math.tanh %234 : vector<2x32xf32>
    %236 = vector.extract_strided_slice %233 {offsets = [0, 0], sizes = [2, 32], strides = [1, 1]} : vector<2x96xf32> to vector<2x32xf32>
    %237 = vector.extract_strided_slice %233 {offsets = [0, 32], sizes = [2, 32], strides = [1, 1]} : vector<2x96xf32> to vector<2x32xf32>
    %238 = vector.extract_strided_slice %233 {offsets = [0, 64], sizes = [2, 32], strides = [1, 1]} : vector<2x96xf32> to vector<2x32xf32>
    %239 = arith.mulf %237, %202 : vector<2x32xf32>
    %240 = arith.mulf %236, %235 : vector<2x32xf32>
    %241 = arith.addf %239, %240 : vector<2x32xf32>
    %242 = math.tanh %241 : vector<2x32xf32>
    %243 = arith.mulf %238, %242 : vector<2x32xf32>
    %244 = vector.extract_strided_slice %5 {offsets = [12, 0], sizes = [2, 128], strides = [1, 1]} : vector<16x128xf32> to vector<2x128xf32>
    %cst_36 = arith.constant dense<0.000000e+00> : vector<2x128xf32>
    %245 = tpu.matmul %223, %6, %cst_36 {dimension_numbers = #tpu.dot_dimension_numbers<[1], [0], [0], [1], [0, 0, 1, 1], [], []>} : vector<2x32xf32>, vector<32x128xf32>, vector<2x128xf32> -> vector<2x128xf32>
    %246 = arith.addf %244, %245 : vector<2x128xf32>
    %247 = vector.extract_strided_slice %246 {offsets = [0, 0], sizes = [2, 96], strides = [1, 1]} : vector<2x128xf32> to vector<2x96xf32>
    %248 = arith.negf %247 : vector<2x96xf32>
    %249 = math.exp %248 : vector<2x96xf32>
    %cst_37 = arith.constant 1.000000e+00 : f32
    %250 = vector.broadcast %cst_37 : f32 to vector<2x96xf32>
    %251 = arith.addf %250, %249 : vector<2x96xf32>
    %252 = arith.divf %250, %251 : vector<2x96xf32>
    %253 = vector.extract_strided_slice %246 {offsets = [0, 96], sizes = [2, 32], strides = [1, 1]} : vector<2x128xf32> to vector<2x32xf32>
    %254 = math.tanh %253 : vector<2x32xf32>
    %255 = vector.extract_strided_slice %252 {offsets = [0, 0], sizes = [2, 32], strides = [1, 1]} : vector<2x96xf32> to vector<2x32xf32>
    %256 = vector.extract_strided_slice %252 {offsets = [0, 32], sizes = [2, 32], strides = [1, 1]} : vector<2x96xf32> to vector<2x32xf32>
    %257 = vector.extract_strided_slice %252 {offsets = [0, 64], sizes = [2, 32], strides = [1, 1]} : vector<2x96xf32> to vector<2x32xf32>
    %258 = arith.mulf %256, %221 : vector<2x32xf32>
    %259 = arith.mulf %255, %254 : vector<2x32xf32>
    %260 = arith.addf %258, %259 : vector<2x32xf32>
    %261 = math.tanh %260 : vector<2x32xf32>
    %262 = arith.mulf %257, %261 : vector<2x32xf32>
    %263 = tpu.concatenate %262, %243 in 1 : vector<2x32xf32>, vector<2x32xf32> -> vector<2x64xf32>
    %cst_38 = arith.constant dense<0.000000e+00> : vector<2x128xf32>
    %264 = tpu.matmul %263, %7, %cst_38 {dimension_numbers = #tpu.dot_dimension_numbers<[1], [0], [0], [1], [0, 0, 1, 1], [], []>} : vector<2x64xf32>, vector<64x128xf32>, vector<2x128xf32> -> vector<2x128xf32>
    %265 = vector.broadcast %8 : vector<1x128xf32> to vector<2x128xf32>
    %266 = arith.addf %264, %265 : vector<2x128xf32>
    %267 = vector.extract_strided_slice %266 {offsets = [0, 0], sizes = [2, 96], strides = [1, 1]} : vector<2x128xf32> to vector<2x96xf32>
    %268 = arith.negf %267 : vector<2x96xf32>
    %269 = math.exp %268 : vector<2x96xf32>
    %cst_39 = arith.constant 1.000000e+00 : f32
    %270 = vector.broadcast %cst_39 : f32 to vector<2x96xf32>
    %271 = arith.addf %270, %269 : vector<2x96xf32>
    %272 = arith.divf %270, %271 : vector<2x96xf32>
    %273 = vector.extract_strided_slice %266 {offsets = [0, 96], sizes = [2, 32], strides = [1, 1]} : vector<2x128xf32> to vector<2x32xf32>
    %274 = math.tanh %273 : vector<2x32xf32>
    %275 = vector.extract_strided_slice %272 {offsets = [0, 0], sizes = [2, 32], strides = [1, 1]} : vector<2x96xf32> to vector<2x32xf32>
    %276 = vector.extract_strided_slice %272 {offsets = [0, 32], sizes = [2, 32], strides = [1, 1]} : vector<2x96xf32> to vector<2x32xf32>
    %277 = vector.extract_strided_slice %272 {offsets = [0, 64], sizes = [2, 32], strides = [1, 1]} : vector<2x96xf32> to vector<2x32xf32>
    %278 = arith.mulf %276, %241 : vector<2x32xf32>
    %279 = arith.mulf %275, %274 : vector<2x32xf32>
    %280 = arith.addf %278, %279 : vector<2x32xf32>
    %281 = math.tanh %280 : vector<2x32xf32>
    %282 = arith.mulf %277, %281 : vector<2x32xf32>
    %283 = vector.extract_strided_slice %5 {offsets = [14, 0], sizes = [2, 128], strides = [1, 1]} : vector<16x128xf32> to vector<2x128xf32>
    %cst_40 = arith.constant dense<0.000000e+00> : vector<2x128xf32>
    %284 = tpu.matmul %262, %6, %cst_40 {dimension_numbers = #tpu.dot_dimension_numbers<[1], [0], [0], [1], [0, 0, 1, 1], [], []>} : vector<2x32xf32>, vector<32x128xf32>, vector<2x128xf32> -> vector<2x128xf32>
    %285 = arith.addf %283, %284 : vector<2x128xf32>
    %286 = vector.extract_strided_slice %285 {offsets = [0, 0], sizes = [2, 96], strides = [1, 1]} : vector<2x128xf32> to vector<2x96xf32>
    %287 = arith.negf %286 : vector<2x96xf32>
    %288 = math.exp %287 : vector<2x96xf32>
    %cst_41 = arith.constant 1.000000e+00 : f32
    %289 = vector.broadcast %cst_41 : f32 to vector<2x96xf32>
    %290 = arith.addf %289, %288 : vector<2x96xf32>
    %291 = arith.divf %289, %290 : vector<2x96xf32>
    %292 = vector.extract_strided_slice %285 {offsets = [0, 96], sizes = [2, 32], strides = [1, 1]} : vector<2x128xf32> to vector<2x32xf32>
    %293 = math.tanh %292 : vector<2x32xf32>
    %294 = vector.extract_strided_slice %291 {offsets = [0, 0], sizes = [2, 32], strides = [1, 1]} : vector<2x96xf32> to vector<2x32xf32>
    %295 = vector.extract_strided_slice %291 {offsets = [0, 32], sizes = [2, 32], strides = [1, 1]} : vector<2x96xf32> to vector<2x32xf32>
    %296 = vector.extract_strided_slice %291 {offsets = [0, 64], sizes = [2, 32], strides = [1, 1]} : vector<2x96xf32> to vector<2x32xf32>
    %297 = arith.mulf %295, %260 : vector<2x32xf32>
    %298 = arith.mulf %294, %293 : vector<2x32xf32>
    %299 = arith.addf %297, %298 : vector<2x32xf32>
    %300 = math.tanh %299 : vector<2x32xf32>
    %301 = arith.mulf %296, %300 : vector<2x32xf32>
    %302 = tpu.concatenate %301, %282 in 1 : vector<2x32xf32>, vector<2x32xf32> -> vector<2x64xf32>
    %cst_42 = arith.constant dense<0.000000e+00> : vector<2x128xf32>
    %303 = tpu.matmul %302, %7, %cst_42 {dimension_numbers = #tpu.dot_dimension_numbers<[1], [0], [0], [1], [0, 0, 1, 1], [], []>} : vector<2x64xf32>, vector<64x128xf32>, vector<2x128xf32> -> vector<2x128xf32>
    %304 = vector.broadcast %8 : vector<1x128xf32> to vector<2x128xf32>
    %305 = arith.addf %303, %304 : vector<2x128xf32>
    %306 = vector.extract_strided_slice %305 {offsets = [0, 0], sizes = [2, 96], strides = [1, 1]} : vector<2x128xf32> to vector<2x96xf32>
    %307 = arith.negf %306 : vector<2x96xf32>
    %308 = math.exp %307 : vector<2x96xf32>
    %cst_43 = arith.constant 1.000000e+00 : f32
    %309 = vector.broadcast %cst_43 : f32 to vector<2x96xf32>
    %310 = arith.addf %309, %308 : vector<2x96xf32>
    %311 = arith.divf %309, %310 : vector<2x96xf32>
    %312 = vector.extract_strided_slice %305 {offsets = [0, 96], sizes = [2, 32], strides = [1, 1]} : vector<2x128xf32> to vector<2x32xf32>
    %313 = math.tanh %312 : vector<2x32xf32>
    %314 = vector.extract_strided_slice %311 {offsets = [0, 0], sizes = [2, 32], strides = [1, 1]} : vector<2x96xf32> to vector<2x32xf32>
    %315 = vector.extract_strided_slice %311 {offsets = [0, 32], sizes = [2, 32], strides = [1, 1]} : vector<2x96xf32> to vector<2x32xf32>
    %316 = vector.extract_strided_slice %311 {offsets = [0, 64], sizes = [2, 32], strides = [1, 1]} : vector<2x96xf32> to vector<2x32xf32>
    %317 = arith.mulf %315, %280 : vector<2x32xf32>
    %318 = arith.mulf %314, %313 : vector<2x32xf32>
    %319 = arith.addf %317, %318 : vector<2x32xf32>
    %320 = math.tanh %319 : vector<2x32xf32>
    %321 = arith.mulf %316, %320 : vector<2x32xf32>
    %c0_44 = arith.constant 0 : index
    %c0_45 = arith.constant 0 : index
    %322 = vector.load %arg6[%c0_44, %c0_45] : memref<32x128xf32, #tpu.memory_space<vmem>>, vector<32x128xf32>
    %cst_46 = arith.constant dense<0.000000e+00> : vector<2x128xf32>
    %323 = tpu.matmul %321, %322, %cst_46 {dimension_numbers = #tpu.dot_dimension_numbers<[1], [0], [0], [1], [0, 0, 1, 1], [], []>} : vector<2x32xf32>, vector<32x128xf32>, vector<2x128xf32> -> vector<2x128xf32>
    %c0_47 = arith.constant 0 : index
    %c0_48 = arith.constant 0 : index
    %324 = vector.load %arg7[%c0_47, %c0_48] : memref<1x128xf32, #tpu.memory_space<vmem>>, vector<1x128xf32>
    %325 = vector.broadcast %324 : vector<1x128xf32> to vector<2x128xf32>
    %326 = arith.addf %323, %325 : vector<2x128xf32>
    %c0_49 = arith.constant 0 : index
    %c0_50 = arith.constant 0 : index
    %327 = vector.load %arg8[%c0_49, %c0_50] : memref<2x128xf32, #tpu.memory_space<vmem>>, vector<2x128xf32>
    tpu.vector_store %arg8[%c0_49, %c0_50], %326 {strides = array<i32>} : memref<2x128xf32, #tpu.memory_space<vmem>>, vector<2x128xf32>,
    return
  }
}

</mosaic_0001>

<llo_original>
// kernel: tpu_custom_call.1
$region0: #{tpu_custom_call.1}
  #allocation0 [shape = 'u32[]', space=smem, size = 0x4, offset = 0x4, fixed_abs, tag = 'smem constant byte address 0x4 - core index']
  #allocation1 [shape = 'u32[144,128]{1,0:T(1,128)}', space=vmem, size = 0x12000, scoped, tag = 'internal scratch']
  %s0 = inlined_call_operand.hbm [shape: f32[16,50], index: 0, kind: input, shape index: {}]
  %s1 = inlined_call_operand.hbm [shape: f32[50,128], index: 1, kind: input, shape index: {}]
  %s2 = inlined_call_operand.hbm [shape: f32[32,128], index: 2, kind: input, shape index: {}]
  %s3 = inlined_call_operand.vmem [shape: f32[1,128], index: 3, kind: input, shape index: {}]
  %s4 = inlined_call_operand.hbm [shape: f32[64,128], index: 4, kind: input, shape index: {}]
  %s5 = inlined_call_operand.vmem [shape: f32[1,128], index: 5, kind: input, shape index: {}]
  %s6 = inlined_call_operand.hbm [shape: f32[32,128], index: 6, kind: input, shape index: {}]
  %s7 = inlined_call_operand.vmem [shape: f32[1,128], index: 7, kind: input, shape index: {}]
  %s8 = inlined_call_operand.hbm [shape: f32[2,128], index: 8, kind: output, shape index: {}]
  %s9 = sld [smem:[#allocation0]]
  $region62: #{tpu_custom_call.1} parent=0
    _
  %s11 = ssub.s32 1, %s9
  %s12 = scalar_select 0, %s11, %s9
  $region1: #{tpu_custom_call.1} parent=0
    #allocation2 [shape = 'u8[8192]{0}', space=vmem, size = 0x2000, scoped, tag = 'input window, operand 0, single buffered']
    #allocation3 [shape = 's32[1]{0}', space=sflag, size = 0x4, scoped, tag = 'scoped memory for tpu_custom_call.1']
    #allocation4 [shape = 's32[1]{0}', space=sflag, size = 0x4, scoped, tag = 'scoped memory for tpu_custom_call.1']
    #allocation5 [shape = 'u8[28672]{0}', space=vmem, size = 0x7000, scoped, tag = 'input window, operand 1, single buffered']
    #allocation6 [shape = 's32[1]{0}', space=sflag, size = 0x4, scoped, tag = 'scoped memory for tpu_custom_call.1']
    #allocation7 [shape = 'u8[16384]{0}', space=vmem, size = 0x4000, scoped, tag = 'input window, operand 2, single buffered']
    #allocation8 [shape = 'u8[32768]{0}', space=vmem, size = 0x8000, scoped, tag = 'input window, operand 4, single buffered']
    #allocation9 [shape = 's32[1]{0}', space=sflag, size = 0x4, scoped, tag = 'scoped memory for tpu_custom_call.1']
    #allocation10 [shape = 'u8[16384]{0}', space=vmem, size = 0x4000, scoped, tag = 'input window, operand 6, single buffered']
    #allocation11 [shape = 'u8[1024]{0}', space=vmem, size = 0x400, scoped, tag = 'output window, operand 0, single buffered']
    %13 = vsyncpa [#allocation3], 0
    %14 = vsyncpa [#allocation6], 0
    %15 = vsyncpa [#allocation9], 0
    %16 = vsyncpa [#allocation4], 0
    // Predicated region
    $region2: #{tpu_custom_call.1} parent=1 // pred_check
      _
    $region3: #{tpu_custom_call.1} parent=1 // pred_check_branch
      %18 = sbr.rel (0) target = $region5
    $region4: #{tpu_custom_call.1} parent=1 // pred_region
      %s20 = ssub.s32 256, 256
      %21 = vsyncadd [#allocation3], %s20
      %s22 = sshll.u32 [#allocation2], 4
      %s23 = int_to_ptr.vmem [resolvable:$true] %s22
      %28 = dma.hbm_to_vmem [thread:$0]  %s0, 256, %s23, [#allocation3], 128, 128, 8
    $region5: #{tpu_custom_call.1} parent=1 // pred_fallthru
      _
    // Predicated region
    $region6: #{tpu_custom_call.1} parent=1 // pred_check
      _
    $region7: #{tpu_custom_call.1} parent=1 // pred_check_branch
      %30 = sbr.rel (0) target = $region9
    $region8: #{tpu_custom_call.1} parent=1 // pred_region
      %s32 = ssub.s32 896, 896
      %33 = vsyncadd [#allocation6], %s32
      %s34 = sshll.u32 [#allocation5], 4
      %s35 = int_to_ptr.vmem [resolvable:$true] %s34
      %40 = dma.hbm_to_vmem [thread:$0]  %s1, 896, %s35, [#allocation6], 128, 128, 8
    $region9: #{tpu_custom_call.1} parent=1 // pred_fallthru
      _
    // Predicated region
    $region10: #{tpu_custom_call.1} parent=1 // pred_check
      _
    $region11: #{tpu_custom_call.1} parent=1 // pred_check_branch
      %42 = sbr.rel (0) target = $region13
    $region12: #{tpu_custom_call.1} parent=1 // pred_region
      %s44 = ssub.s32 512, 512
      %45 = vsyncadd [#allocation6], %s44
      %s46 = sshll.u32 [#allocation7], 4
      %s47 = int_to_ptr.vmem [resolvable:$true] %s46
      %52 = dma.hbm_to_vmem [thread:$0]  %s2, 512, %s47, [#allocation6], 128, 128, 8
    $region13: #{tpu_custom_call.1} parent=1 // pred_fallthru
      _
    // Predicated region
    $region14: #{tpu_custom_call.1} parent=1 // pred_check
      _
    $region15: #{tpu_custom_call.1} parent=1 // pred_check_branch
      %54 = sbr.rel (0) target = $region17
    $region16: #{tpu_custom_call.1} parent=1 // pred_region
      _
    $region17: #{tpu_custom_call.1} parent=1 // pred_fallthru
      _
    // Predicated region
    $region18: #{tpu_custom_call.1} parent=1 // pred_check
      _
    $region19: #{tpu_custom_call.1} parent=1 // pred_check_branch
      %56 = sbr.rel (0) target = $region21
    $region20: #{tpu_custom_call.1} parent=1 // pred_region
      %s58 = ssub.s32 1024, 1024
      %59 = vsyncadd [#allocation9], %s58
      %s60 = sshll.u32 [#allocation8], 4
      %s61 = int_to_ptr.vmem [resolvable:$true] %s60
      %66 = dma.hbm_to_vmem [thread:$0]  %s4, 1024, %s61, [#allocation9], 128, 128, 8
    $region21: #{tpu_custom_call.1} parent=1 // pred_fallthru
      _
    // Predicated region
    $region22: #{tpu_custom_call.1} parent=1 // pred_check
      _
    $region23: #{tpu_custom_call.1} parent=1 // pred_check_branch
      %68 = sbr.rel (0) target = $region25
    $region24: #{tpu_custom_call.1} parent=1 // pred_region
      _
    $region25: #{tpu_custom_call.1} parent=1 // pred_fallthru
      _
    // Predicated region
    $region26: #{tpu_custom_call.1} parent=1 // pred_check
      _
    $region27: #{tpu_custom_call.1} parent=1 // pred_check_branch
      %70 = sbr.rel (0) target = $region29
    $region28: #{tpu_custom_call.1} parent=1 // pred_region
      %s72 = ssub.s32 512, 512
      %73 = vsyncadd [#allocation9], %s72
      %s74 = sshll.u32 [#allocation10], 4
      %s75 = int_to_ptr.vmem [resolvable:$true] %s74
      %80 = dma.hbm_to_vmem [thread:$0]  %s6, 512, %s75, [#allocation9], 128, 128, 8
    $region29: #{tpu_custom_call.1} parent=1 // pred_fallthru
      _
    // Predicated region
    $region30: #{tpu_custom_call.1} parent=1 // pred_check
      _
    $region31: #{tpu_custom_call.1} parent=1 // pred_check_branch
      %82 = sbr.rel (0) target = $region33
    $region32: #{tpu_custom_call.1} parent=1 // pred_region
      _
    $region33: #{tpu_custom_call.1} parent=1 // pred_fallthru
      _
    // Predicated region
    $region34: #{tpu_custom_call.1} parent=1 // pred_check
      _
    $region35: #{tpu_custom_call.1} parent=1 // pred_check_branch
      %84 = sbr.rel (0) target = $region37
    $region36: #{tpu_custom_call.1} parent=1 // pred_region
      %85 = dma.done [#allocation3], 256
    $region37: #{tpu_custom_call.1} parent=1 // pred_fallthru
      _
    // Predicated region
    $region38: #{tpu_custom_call.1} parent=1 // pred_check
      _
    $region39: #{tpu_custom_call.1} parent=1 // pred_check_branch
      %87 = sbr.rel (0) target = $region41
    $region40: #{tpu_custom_call.1} parent=1 // pred_region
      %88 = dma.done [#allocation6], 896
    $region41: #{tpu_custom_call.1} parent=1 // pred_fallthru
      _
    // Predicated region
    $region42: #{tpu_custom_call.1} parent=1 // pred_check
      _
    $region43: #{tpu_custom_call.1} parent=1 // pred_check_branch
      %90 = sbr.rel (0) target = $region45
    $region44: #{tpu_custom_call.1} parent=1 // pred_region
      %91 = dma.done [#allocation6], 512
    $region45: #{tpu_custom_call.1} parent=1 // pred_fallthru
      _
    // Predicated region
    $region46: #{tpu_custom_call.1} parent=1 // pred_check
      _
    $region47: #{tpu_custom_call.1} parent=1 // pred_check_branch
      %93 = sbr.rel (0) target = $region49
    $region48: #{tpu_custom_call.1} parent=1 // pred_region
      %94 = dma.done [#allocation9], 1024
    $region49: #{tpu_custom_call.1} parent=1 // pred_fallthru
      _
    // Predicated region
    $region50: #{tpu_custom_call.1} parent=1 // pred_check
      _
    $region51: #{tpu_custom_call.1} parent=1 // pred_check_branch
      %96 = sbr.rel (0) target = $region53
    $region52: #{tpu_custom_call.1} parent=1 // pred_region
      %97 = dma.done [#allocation9], 512
    $region53: #{tpu_custom_call.1} parent=1 // pred_fallthru
      _
    %v98 = vld [vmem:[#allocation2] sm:$0xff]
    %v99 = vld [vmem:[#allocation2 + $0x8] sm:$0xff]
    %v100 = vld [vmem:[#allocation5] sm:$0xff]
    %v101 = vld [vmem:[#allocation5 + $0x8] sm:$0xff]
    %v102 = vld [vmem:[#allocation5 + $0x10] sm:$0xff]
    %v103 = vld [vmem:[#allocation5 + $0x18] sm:$0xff]
    %v104 = vld [vmem:[#allocation5 + $0x20] sm:$0xff]
    %v105 = vld [vmem:[#allocation5 + $0x28] sm:$0xff]
    %v106 = vld [vmem:[#allocation5 + $0x30] sm:$0x3]
    %v107 = vld [vmem:[%s3] sm:$0x1]
    %v109 = vlaneseq
    %v110 = vshrl.u32 %v109, 7
    %v111 = vsub.s32 0, %v110
    %v112 = vrot.slane %v107, %v111
    %vm114 = vcmask 408576
    %v116 = vsel %vm114, %v98, 0
    %v119 = vsel %vm114, %v99, 0
    %vm121 = vcmask 1041408
    %v123 = vsel %vm121, %v106, 0
    %125 = vmatprep.subr.mxu0 0.0
    %126 = vmatpush1.msra.mxu0 %v100
    %127 = vmatprep.subr.mxu0 0.0
    %128 = vmatpush1.msra.mxu0 %v101
    %129 = vmatprep.subr.mxu0 0.0
    %130 = vmatpush1.msra.mxu0 %v102
    %131 = vmatprep.subr.mxu0 0.0
    %132 = vmatpush1.msra.mxu0 %v103
    %133 = vmatprep.subr.mxu0 0.0
    %134 = vmatpush1.msra.mxu0 %v104
    %135 = vmatprep.subr.mxu0 0.0
    %136 = vmatpush1.msra.mxu0 %v105
    %137 = vmatprep.subr.mxu0 0.0
    %138 = vmatpush1.msra.mxu0 %v123
    %139 = vmatprep.subr.mxu0 0.0
    %140 = vmatpush1.msra.mxu0 0.0
    %141 = vmatprep.subr.mxu0 0.0
    %142 = vmatpush1.msra.mxu0 0.0
    %143 = vmatprep.subr.mxu0 0.0
    %144 = vmatpush1.msra.mxu0 0.0
    %145 = vmatprep.subr.mxu0 0.0
    %146 = vmatpush1.msra.mxu0 0.0
    %147 = vmatprep.subr.mxu0 0.0
    %148 = vmatpush1.msra.mxu0 0.0
    %149 = vmatprep.subr.mxu0 0.0
    %150 = vmatpush1.msra.mxu0 0.0
    %151 = vmatprep.subr.mxu0 0.0
    %152 = vmatpush1.msra.mxu0 0.0
    %153 = vmatprep.subr.mxu0 0.0
    %154 = vmatpush1.msra.mxu0 0.0
    %155 = vmatprep.subr.mxu0 0.0
    %156 = vmatpush1.msra.mxu0 0.0
    %157 = vmatprep.subr.mxu0 0.0
    %158 = vmatpush1.msra.mxu0 0.0
    %159 = vmatprep.subr.mxu0 0.0
    %160 = vmatpush1.msra.mxu0 0.0
    %161 = vmatprep.subr.mxu0 0.0
    %162 = vmatpush1.msra.mxu0 0.0
    %163 = vmatprep.subr.mxu0 0.0
    %164 = vmatpush1.msra.mxu0 0.0
    %165 = vmatprep.subr.mxu0 0.0
    %166 = vmatpush1.msra.mxu0 0.0
    %167 = vmatprep.subr.mxu0 0.0
    %168 = vmatpush1.msra.mxu0 0.0
    %169 = vmatprep.subr.mxu0 0.0
    %170 = vmatpush1.msra.mxu0 0.0
    %171 = vmatprep.subr.mxu0 0.0
    %172 = vmatpush1.msra.mxu0 0.0
    %173 = vmatprep.subr.mxu0 0.0
    %174 = vmatpush1.msra.mxu0 0.0
    %175 = vmatprep.subr.mxu0 0.0
    %176 = vmatpush1.msra.mxu0 0.0
    %177 = vmatprep.subr.mxu0 0.0
    %178 = vmatpush1.msra.mxu0 0.0
    %179 = vmatprep.subr.mxu0 0.0
    %180 = vmatpush1.msra.mxu0 0.0
    %181 = vmatprep.subr.mxu0 0.0
    %182 = vmatpush1.msra.mxu0 0.0
    %183 = vmatprep.subr.mxu0 0.0
    %184 = vmatpush1.msra.mxu0 0.0
    %185 = vmatprep.subr.mxu0 0.0
    %186 = vmatpush1.msra.mxu0 0.0
    %187 = vmatprep.subr.mxu0 0.0
    %188 = vmatpush1.msra.mxu0 0.0
    %189 = vmatprep.mubr.f32.mxu0 0.0
    %190 = vmatmul.mubr.f32.gmra.mrb[0].mxu0 %v116
    %v191 = vpop.f32.mrb[0].mxu0
    %v192 = vadd.f32 %v112, %v191
    %v193 = vpop.f32.mrb[0].mxu0
    %194 = vmatprep.mubr.f32.mxu0 0.0
    %195 = vmatmul.mubr.f32.gmra.mrb[0].mxu0 %v119
    %v196 = vpop.f32.mrb[0].mxu0
    %v197 = vadd.f32 %v112, %v196
    %v198 = vpop.f32.mrb[0].mxu0
    %199 = vdwg.mxu0
    %v200 = vld [vmem:[#allocation7] sm:$0xff]
    %v201 = vld [vmem:[#allocation7 + $0x8] sm:$0xff]
    %v202 = vld [vmem:[#allocation7 + $0x10] sm:$0xff]
    %v203 = vld [vmem:[#allocation7 + $0x18] sm:$0xff]
    %v204 = vld [vmem:[#allocation8] sm:$0xff]
    %v205 = vld [vmem:[#allocation8 + $0x8] sm:$0xff]
    %v206 = vld [vmem:[#allocation8 + $0x10] sm:$0xff]
    %v207 = vld [vmem:[#allocation8 + $0x18] sm:$0xff]
    %v208 = vld [vmem:[#allocation8 + $0x20] sm:$0xff]
    %v209 = vld [vmem:[#allocation8 + $0x28] sm:$0xff]
    %v210 = vld [vmem:[#allocation8 + $0x30] sm:$0xff]
    %v211 = vld [vmem:[#allocation8 + $0x38] sm:$0xff]
    %v212 = vld [vmem:[%s5] sm:$0x1]
    %vm213 = vcmask 261120
    %v215 = vsel %vm213, 0.0, 0
    %217 = vmatprep.subr.mxu0 0.0
    %218 = vmatpush1.msra.mxu0 %v200
    %219 = vmatprep.subr.mxu0 0.0
    %220 = vmatpush1.msra.mxu0 %v201
    %221 = vmatprep.subr.mxu0 0.0
    %222 = vmatpush1.msra.mxu0 %v202
    %223 = vmatprep.subr.mxu0 0.0
    %224 = vmatpush1.msra.mxu0 %v203
    %225 = vmatprep.subr.mxu0 0.0
    %226 = vmatpush1.msra.mxu0 0.0
    %227 = vmatprep.subr.mxu0 0.0
    %228 = vmatpush1.msra.mxu0 0.0
    %229 = vmatprep.subr.mxu0 0.0
    %230 = vmatpush1.msra.mxu0 0.0
    %231 = vmatprep.subr.mxu0 0.0
    %232 = vmatpush1.msra.mxu0 0.0
    %233 = vmatprep.subr.mxu0 0.0
    %234 = vmatpush1.msra.mxu0 0.0
    %235 = vmatprep.subr.mxu0 0.0
    %236 = vmatpush1.msra.mxu0 0.0
    %237 = vmatprep.subr.mxu0 0.0
    %238 = vmatpush1.msra.mxu0 0.0
    %239 = vmatprep.subr.mxu0 0.0
    %240 = vmatpush1.msra.mxu0 0.0
    %241 = vmatprep.subr.mxu0 0.0
    %242 = vmatpush1.msra.mxu0 0.0
    %243 = vmatprep.subr.mxu0 0.0
    %244 = vmatpush1.msra.mxu0 0.0
    %245 = vmatprep.subr.mxu0 0.0
    %246 = vmatpush1.msra.mxu0 0.0
    %247 = vmatprep.subr.mxu0 0.0
    %248 = vmatpush1.msra.mxu0 0.0
    %249 = vmatprep.subr.mxu0 0.0
    %250 = vmatpush1.msra.mxu0 0.0
    %251 = vmatprep.subr.mxu0 0.0
    %252 = vmatpush1.msra.mxu0 0.0
    %253 = vmatprep.subr.mxu0 0.0
    %254 = vmatpush1.msra.mxu0 0.0
    %255 = vmatprep.subr.mxu0 0.0
    %256 = vmatpush1.msra.mxu0 0.0
    %257 = vmatprep.subr.mxu0 0.0
    %258 = vmatpush1.msra.mxu0 0.0
    %259 = vmatprep.subr.mxu0 0.0
    %260 = vmatpush1.msra.mxu0 0.0
    %261 = vmatprep.subr.mxu0 0.0
    %262 = vmatpush1.msra.mxu0 0.0
    %263 = vmatprep.subr.mxu0 0.0
    %264 = vmatpush1.msra.mxu0 0.0
    %265 = vmatprep.subr.mxu0 0.0
    %266 = vmatpush1.msra.mxu0 0.0
    %267 = vmatprep.subr.mxu0 0.0
    %268 = vmatpush1.msra.mxu0 0.0
    %269 = vmatprep.subr.mxu0 0.0
    %270 = vmatpush1.msra.mxu0 0.0
    %271 = vmatprep.subr.mxu0 0.0
    %272 = vmatpush1.msra.mxu0 0.0
    %273 = vmatprep.subr.mxu0 0.0
    %274 = vmatpush1.msra.mxu0 0.0
    %275 = vmatprep.subr.mxu0 0.0
    %276 = vmatpush1.msra.mxu0 0.0
    %277 = vmatprep.subr.mxu0 0.0
    %278 = vmatpush1.msra.mxu0 0.0
    %279 = vmatprep.subr.mxu0 0.0
    %280 = vmatpush1.msra.mxu0 0.0
    %281 = vmatprep.mubr.f32.mxu0 0.0
    %282 = vmatmul.mubr.f32.gmra.mrb[0].mxu0 %v215
    %v283 = vpop.f32.mrb[0].mxu0
    %v284 = vadd.f32 0.0, %v283
    %v285 = vpop.f32.mrb[0].mxu0
    %286 = vdwg.mxu0
    %v287 = vadd.f32 %v192, %v284
    %v288 = vxor.u32 %v287, 2147483648
    %v289 = vmul.f32 %v288, 1.442695
    %v290 = vpow.pop %v289
    %v291 = vadd.f32 %v290, 1.0
    %v292 = vrcp.pop %v291
    %v293 = vmul.f32 1.0, %v292
    %v294 = vtanh.pop %v287
    %v295 = vmul.f32 %v293, 0.0
    %297 = vrot.lane.b32.xlu0 %v294, 32
    %v298 = vpop.permute.xlu0 %297
    %v300 = vmul.f32 %v293, %v298
    %302 = vrot.lane.b32.xlu0 %v300, 32
    %v303 = vpop.permute.xlu0 %302
    %v305 = vadd.f32 %v295, %v303
    %v306 = vtanh.pop %v305
    %308 = vrot.lane.b32.xlu0 %v306, 32
    %v309 = vpop.permute.xlu0 %308
    %v311 = vmul.f32 %v293, %v309
    %313 = vrot.lane.b32.xlu0 %v311, 64
    %v314 = vpop.permute.xlu0 %313
    %v316 = vsel %vm213, %v314, 0.0
    %v318 = vlaneseq
    %v319 = vshrl.u32 %v318, 7
    %v320 = vsub.s32 0, %v319
    %v321 = vrot.slane %v212, %v320
    %vm323 = vcmask 523264
    %v325 = vsel %vm323, %v316, 0
    %327 = vmatprep.subr.mxu0 0.0
    %328 = vmatpush1.msra.mxu0 %v204
    %329 = vmatprep.subr.mxu0 0.0
    %330 = vmatpush1.msra.mxu0 %v205
    %331 = vmatprep.subr.mxu0 0.0
    %332 = vmatpush1.msra.mxu0 %v206
    %333 = vmatprep.subr.mxu0 0.0
    %334 = vmatpush1.msra.mxu0 %v207
    %335 = vmatprep.subr.mxu0 0.0
    %336 = vmatpush1.msra.mxu0 %v208
    %337 = vmatprep.subr.mxu0 0.0
    %338 = vmatpush1.msra.mxu0 %v209
    %339 = vmatprep.subr.mxu0 0.0
    %340 = vmatpush1.msra.mxu0 %v210
    %341 = vmatprep.subr.mxu0 0.0
    %342 = vmatpush1.msra.mxu0 %v211
    %343 = vmatprep.subr.mxu0 0.0
    %344 = vmatpush1.msra.mxu0 0.0
    %345 = vmatprep.subr.mxu0 0.0
    %346 = vmatpush1.msra.mxu0 0.0
    %347 = vmatprep.subr.mxu0 0.0
    %348 = vmatpush1.msra.mxu0 0.0
    %349 = vmatprep.subr.mxu0 0.0
    %350 = vmatpush1.msra.mxu0 0.0
    %351 = vmatprep.subr.mxu0 0.0
    %352 = vmatpush1.msra.mxu0 0.0
    %353 = vmatprep.subr.mxu0 0.0
    %354 = vmatpush1.msra.mxu0 0.0
    %355 = vmatprep.subr.mxu0 0.0
    %356 = vmatpush1.msra.mxu0 0.0
    %357 = vmatprep.subr.mxu0 0.0
    %358 = vmatpush1.msra.mxu0 0.0
    %359 = vmatprep.subr.mxu0 0.0
    %360 = vmatpush1.msra.mxu0 0.0
    %361 = vmatprep.subr.mxu0 0.0
    %362 = vmatpush1.msra.mxu0 0.0
    %363 = vmatprep.subr.mxu0 0.0
    %364 = vmatpush1.msra.mxu0 0.0
    %365 = vmatprep.subr.mxu0 0.0
    %366 = vmatpush1.msra.mxu0 0.0
    %367 = vmatprep.subr.mxu0 0.0
    %368 = vmatpush1.msra.mxu0 0.0
    %369 = vmatprep.subr.mxu0 0.0
    %370 = vmatpush1.msra.mxu0 0.0
    %371 = vmatprep.subr.mxu0 0.0
    %372 = vmatpush1.msra.mxu0 0.0
    %373 = vmatprep.subr.mxu0 0.0
    %374 = vmatpush1.msra.mxu0 0.0
    %375 = vmatprep.subr.mxu0 0.0
    %376 = vmatpush1.msra.mxu0 0.0
    %377 = vmatprep.subr.mxu0 0.0
    %378 = vmatpush1.msra.mxu0 0.0
    %379 = vmatprep.subr.mxu0 0.0
    %380 = vmatpush1.msra.mxu0 0.0
    %381 = vmatprep.subr.mxu0 0.0
    %382 = vmatpush1.msra.mxu0 0.0
    %383 = vmatprep.subr.mxu0 0.0
    %384 = vmatpush1.msra.mxu0 0.0
    %385 = vmatprep.subr.mxu0 0.0
    %386 = vmatpush1.msra.mxu0 0.0
    %387 = vmatprep.subr.mxu0 0.0
    %388 = vmatpush1.msra.mxu0 0.0
    %389 = vmatprep.subr.mxu0 0.0
    %390 = vmatpush1.msra.mxu0 0.0
    %391 = vmatprep.mubr.f32.mxu0 0.0
    %392 = vmatmul.mubr.f32.gmra.mrb[0].mxu0 %v325
    %v393 = vpop.f32.mrb[0].mxu0
    %v394 = vadd.f32 %v321, %v393
    %v395 = vpop.f32.mrb[0].mxu0
    %396 = vdwg.mxu0
    %v397 = vxor.u32 %v394, 2147483648
    %v398 = vmul.f32 %v397, 1.442695
    %v399 = vpow.pop %v398
    %v400 = vadd.f32 %v399, 1.0
    %v401 = vrcp.pop %v400
    %v402 = vmul.f32 1.0, %v401
    %v403 = vtanh.pop %v394
    %v404 = vmul.f32 %v402, 0.0
    %406 = vrot.lane.b32.xlu0 %v403, 32
    %v407 = vpop.permute.xlu0 %406
    %v409 = vmul.f32 %v402, %v407
    %411 = vrot.lane.b32.xlu0 %v409, 32
    %v412 = vpop.permute.xlu0 %411
    %v414 = vadd.f32 %v404, %v412
    %v415 = vtanh.pop %v414
    %417 = vrot.lane.b32.xlu0 %v415, 32
    %v418 = vpop.permute.xlu0 %417
    %v420 = vmul.f32 %v402, %v418
    %v421 = vsel %vm213, %v314, 0
    %423 = vmatprep.subr.mxu0 0.0
    %424 = vmatpush1.msra.mxu0 %v200
    %425 = vmatprep.subr.mxu0 0.0
    %426 = vmatpush1.msra.mxu0 %v201
    %427 = vmatprep.subr.mxu0 0.0
    %428 = vmatpush1.msra.mxu0 %v202
    %429 = vmatprep.subr.mxu0 0.0
    %430 = vmatpush1.msra.mxu0 %v203
    %431 = vmatprep.subr.mxu0 0.0
    %432 = vmatpush1.msra.mxu0 0.0
    %433 = vmatprep.subr.mxu0 0.0
    %434 = vmatpush1.msra.mxu0 0.0
    %435 = vmatprep.subr.mxu0 0.0
    %436 = vmatpush1.msra.mxu0 0.0
    %437 = vmatprep.subr.mxu0 0.0
    %438 = vmatpush1.msra.mxu0 0.0
    %439 = vmatprep.subr.mxu0 0.0
    %440 = vmatpush1.msra.mxu0 0.0
    %441 = vmatprep.subr.mxu0 0.0
    %442 = vmatpush1.msra.mxu0 0.0
    %443 = vmatprep.subr.mxu0 0.0
    %444 = vmatpush1.msra.mxu0 0.0
    %445 = vmatprep.subr.mxu0 0.0
    %446 = vmatpush1.msra.mxu0 0.0
    %447 = vmatprep.subr.mxu0 0.0
    %448 = vmatpush1.msra.mxu0 0.0
    %449 = vmatprep.subr.mxu0 0.0
    %450 = vmatpush1.msra.mxu0 0.0
    %451 = vmatprep.subr.mxu0 0.0
    %452 = vmatpush1.msra.mxu0 0.0
    %453 = vmatprep.subr.mxu0 0.0
    %454 = vmatpush1.msra.mxu0 0.0
    %455 = vmatprep.subr.mxu0 0.0
    %456 = vmatpush1.msra.mxu0 0.0
    %457 = vmatprep.subr.mxu0 0.0
    %458 = vmatpush1.msra.mxu0 0.0
    %459 = vmatprep.subr.mxu0 0.0
    %460 = vmatpush1.msra.mxu0 0.0
    %461 = vmatprep.subr.mxu0 0.0
    %462 = vmatpush1.msra.mxu0 0.0
    %463 = vmatprep.subr.mxu0 0.0
    %464 = vmatpush1.msra.mxu0 0.0
    %465 = vmatprep.subr.mxu0 0.0
    %466 = vmatpush1.msra.mxu0 0.0
    %467 = vmatprep.subr.mxu0 0.0
    %468 = vmatpush1.msra.mxu0 0.0
    %469 = vmatprep.subr.mxu0 0.0
    %470 = vmatpush1.msra.mxu0 0.0
    %471 = vmatprep.subr.mxu0 0.0
    %472 = vmatpush1.msra.mxu0 0.0
    %473 = vmatprep.subr.mxu0 0.0
    %474 = vmatpush1.msra.mxu0 0.0
    %475 = vmatprep.subr.mxu0 0.0
    %476 = vmatpush1.msra.mxu0 0.0
    %477 = vmatprep.subr.mxu0 0.0
    %478 = vmatpush1.msra.mxu0 0.0
    %479 = vmatprep.subr.mxu0 0.0
    %480 = vmatpush1.msra.mxu0 0.0
    %481 = vmatprep.subr.mxu0 0.0
    %482 = vmatpush1.msra.mxu0 0.0
    %483 = vmatprep.subr.mxu0 0.0
    %484 = vmatpush1.msra.mxu0 0.0
    %485 = vmatprep.subr.mxu0 0.0
    %486 = vmatpush1.msra.mxu0 0.0
    %487 = vmatprep.mubr.f32.mxu0 0.0
    %488 = vmatmul.mubr.f32.gmra.mrb[0].mxu0 %v421
    %v489 = vpop.f32.mrb[0].mxu0
    %v490 = vadd.f32 0.0, %v489
    %v491 = vpop.f32.mrb[0].mxu0
    %492 = vdwg.mxu0
    %v494 = vrot.slane %v490, 6
    %v496 = vadd.f32 %v192, %v494
    %v497 = vxor.u32 %v496, 2147483648
    %v498 = vmul.f32 %v497, 1.442695
    %v499 = vpow.pop %v498
    %v500 = vadd.f32 %v499, 1.0
    %v501 = vrcp.pop %v500
    %v502 = vmul.f32 1.0, %v501
    %v503 = vtanh.pop %v496
    %v505 = vrot.slane %v305, 6
    %v507 = vmul.f32 %v502, %v505
    %509 = vrot.lane.b32.xlu0 %v503, 32
    %v510 = vpop.permute.xlu0 %509
    %v512 = vmul.f32 %v502, %v510
    %514 = vrot.lane.b32.xlu0 %v512, 32
    %v515 = vpop.permute.xlu0 %514
    %v517 = vadd.f32 %v507, %v515
    %v518 = vtanh.pop %v517
    %520 = vrot.lane.b32.xlu0 %v518, 32
    %v521 = vpop.permute.xlu0 %520
    %v523 = vmul.f32 %v502, %v521
    %525 = vrot.lane.b32.xlu0 %v523, 64
    %v526 = vpop.permute.xlu0 %525
    %v529 = vrot.slane %v420, 6
    %530 = vrot.lane.b32.xlu0 %v529, 96
    %v531 = vpop.permute.xlu0 %530
    %v533 = vsel %vm213, %v526, %v531
    %v535 = vrot.slane %v533, 2
    %v536 = vsel %vm323, %v535, 0
    %538 = vmatprep.subr.mxu0 0.0
    %539 = vmatpush1.msra.mxu0 %v204
    %540 = vmatprep.subr.mxu0 0.0
    %541 = vmatpush1.msra.mxu0 %v205
    %542 = vmatprep.subr.mxu0 0.0
    %543 = vmatpush1.msra.mxu0 %v206
    %544 = vmatprep.subr.mxu0 0.0
    %545 = vmatpush1.msra.mxu0 %v207
    %546 = vmatprep.subr.mxu0 0.0
    %547 = vmatpush1.msra.mxu0 %v208
    %548 = vmatprep.subr.mxu0 0.0
    %549 = vmatpush1.msra.mxu0 %v209
    %550 = vmatprep.subr.mxu0 0.0
    %551 = vmatpush1.msra.mxu0 %v210
    %552 = vmatprep.subr.mxu0 0.0
    %553 = vmatpush1.msra.mxu0 %v211
    %554 = vmatprep.subr.mxu0 0.0
    %555 = vmatpush1.msra.mxu0 0.0
    %556 = vmatprep.subr.mxu0 0.0
    %557 = vmatpush1.msra.mxu0 0.0
    %558 = vmatprep.subr.mxu0 0.0
    %559 = vmatpush1.msra.mxu0 0.0
    %560 = vmatprep.subr.mxu0 0.0
    %561 = vmatpush1.msra.mxu0 0.0
    %562 = vmatprep.subr.mxu0 0.0
    %563 = vmatpush1.msra.mxu0 0.0
    %564 = vmatprep.subr.mxu0 0.0
    %565 = vmatpush1.msra.mxu0 0.0
    %566 = vmatprep.subr.mxu0 0.0
    %567 = vmatpush1.msra.mxu0 0.0
    %568 = vmatprep.subr.mxu0 0.0
    %569 = vmatpush1.msra.mxu0 0.0
    %570 = vmatprep.subr.mxu0 0.0
    %571 = vmatpush1.msra.mxu0 0.0
    %572 = vmatprep.subr.mxu0 0.0
    %573 = vmatpush1.msra.mxu0 0.0
    %574 = vmatprep.subr.mxu0 0.0
    %575 = vmatpush1.msra.mxu0 0.0
    %576 = vmatprep.subr.mxu0 0.0
    %577 = vmatpush1.msra.mxu0 0.0
    %578 = vmatprep.subr.mxu0 0.0
    %579 = vmatpush1.msra.mxu0 0.0
    %580 = vmatprep.subr.mxu0 0.0
    %581 = vmatpush1.msra.mxu0 0.0
    %582 = vmatprep.subr.mxu0 0.0
    %583 = vmatpush1.msra.mxu0 0.0
    %584 = vmatprep.subr.mxu0 0.0
    %585 = vmatpush1.msra.mxu0 0.0
    %586 = vmatprep.subr.mxu0 0.0
    %587 = vmatpush1.msra.mxu0 0.0
    %588 = vmatprep.subr.mxu0 0.0
    %589 = vmatpush1.msra.mxu0 0.0
    %590 = vmatprep.subr.mxu0 0.0
    %591 = vmatpush1.msra.mxu0 0.0
    %592 = vmatprep.subr.mxu0 0.0
    %593 = vmatpush1.msra.mxu0 0.0
    %594 = vmatprep.subr.mxu0 0.0
    %595 = vmatpush1.msra.mxu0 0.0
    %596 = vmatprep.subr.mxu0 0.0
    %597 = vmatpush1.msra.mxu0 0.0
    %598 = vmatprep.subr.mxu0 0.0
    %599 = vmatpush1.msra.mxu0 0.0
    %600 = vmatprep.subr.mxu0 0.0
    %601 = vmatpush1.msra.mxu0 0.0
    %602 = vmatprep.mubr.f32.mxu0 0.0
    %603 = vmatmul.mubr.f32.gmra.mrb[0].mxu0 %v536
    %v604 = vpop.f32.mrb[0].mxu0
    %v605 = vadd.f32 %v321, %v604
    %v606 = vpop.f32.mrb[0].mxu0
    %607 = vdwg.mxu0
    %v608 = vxor.u32 %v605, 2147483648
    %v609 = vmul.f32 %v608, 1.442695
    %v610 = vpow.pop %v609
    %v611 = vadd.f32 %v610, 1.0
    %v612 = vrcp.pop %v611
    %v613 = vmul.f32 1.0, %v612
    %v614 = vtanh.pop %v605
    %v615 = vmul.f32 %v613, %v414
    %617 = vrot.lane.b32.xlu0 %v614, 32
    %v618 = vpop.permute.xlu0 %617
    %v620 = vmul.f32 %v613, %v618
    %622 = vrot.lane.b32.xlu0 %v620, 32
    %v623 = vpop.permute.xlu0 %622
    %v625 = vadd.f32 %v615, %v623
    %v626 = vtanh.pop %v625
    %628 = vrot.lane.b32.xlu0 %v626, 32
    %v629 = vpop.permute.xlu0 %628
    %v631 = vmul.f32 %v613, %v629
    %v632 = vrot.slane %v523, 2
    %633 = vrot.lane.b32.xlu0 %v632, 64
    %v634 = vpop.permute.xlu0 %633
    %v635 = vsel %vm213, %v634, 0
    %637 = vmatprep.subr.mxu0 0.0
    %638 = vmatpush1.msra.mxu0 %v200
    %639 = vmatprep.subr.mxu0 0.0
    %640 = vmatpush1.msra.mxu0 %v201
    %641 = vmatprep.subr.mxu0 0.0
    %642 = vmatpush1.msra.mxu0 %v202
    %643 = vmatprep.subr.mxu0 0.0
    %644 = vmatpush1.msra.mxu0 %v203
    %645 = vmatprep.subr.mxu0 0.0
    %646 = vmatpush1.msra.mxu0 0.0
    %647 = vmatprep.subr.mxu0 0.0
    %648 = vmatpush1.msra.mxu0 0.0
    %649 = vmatprep.subr.mxu0 0.0
    %650 = vmatpush1.msra.mxu0 0.0
    %651 = vmatprep.subr.mxu0 0.0
    %652 = vmatpush1.msra.mxu0 0.0
    %653 = vmatprep.subr.mxu0 0.0
    %654 = vmatpush1.msra.mxu0 0.0
    %655 = vmatprep.subr.mxu0 0.0
    %656 = vmatpush1.msra.mxu0 0.0
    %657 = vmatprep.subr.mxu0 0.0
    %658 = vmatpush1.msra.mxu0 0.0
    %659 = vmatprep.subr.mxu0 0.0
    %660 = vmatpush1.msra.mxu0 0.0
    %661 = vmatprep.subr.mxu0 0.0
    %662 = vmatpush1.msra.mxu0 0.0
    %663 = vmatprep.subr.mxu0 0.0
    %664 = vmatpush1.msra.mxu0 0.0
    %665 = vmatprep.subr.mxu0 0.0
    %666 = vmatpush1.msra.mxu0 0.0
    %667 = vmatprep.subr.mxu0 0.0
    %668 = vmatpush1.msra.mxu0 0.0
    %669 = vmatprep.subr.mxu0 0.0
    %670 = vmatpush1.msra.mxu0 0.0
    %671 = vmatprep.subr.mxu0 0.0
    %672 = vmatpush1.msra.mxu0 0.0
    %673 = vmatprep.subr.mxu0 0.0
    %674 = vmatpush1.msra.mxu0 0.0
    %675 = vmatprep.subr.mxu0 0.0
    %676 = vmatpush1.msra.mxu0 0.0
    %677 = vmatprep.subr.mxu0 0.0
    %678 = vmatpush1.msra.mxu0 0.0
    %679 = vmatprep.subr.mxu0 0.0
    %680 = vmatpush1.msra.mxu0 0.0
    %681 = vmatprep.subr.mxu0 0.0
    %682 = vmatpush1.msra.mxu0 0.0
    %683 = vmatprep.subr.mxu0 0.0
    %684 = vmatpush1.msra.mxu0 0.0
    %685 = vmatprep.subr.mxu0 0.0
    %686 = vmatpush1.msra.mxu0 0.0
    %687 = vmatprep.subr.mxu0 0.0
    %688 = vmatpush1.msra.mxu0 0.0
    %689 = vmatprep.subr.mxu0 0.0
    %690 = vmatpush1.msra.mxu0 0.0
    %691 = vmatprep.subr.mxu0 0.0
    %692 = vmatpush1.msra.mxu0 0.0
    %693 = vmatprep.subr.mxu0 0.0
    %694 = vmatpush1.msra.mxu0 0.0
    %695 = vmatprep.subr.mxu0 0.0
    %696 = vmatpush1.msra.mxu0 0.0
    %697 = vmatprep.subr.mxu0 0.0
    %698 = vmatpush1.msra.mxu0 0.0
    %699 = vmatprep.subr.mxu0 0.0
    %700 = vmatpush1.msra.mxu0 0.0
    %701 = vmatprep.mubr.f32.mxu0 0.0
    %702 = vmatmul.mubr.f32.gmra.mrb[0].mxu0 %v635
    %v703 = vpop.f32.mrb[0].mxu0
    %v704 = vadd.f32 0.0, %v703
    %v705 = vpop.f32.mrb[0].mxu0
    %706 = vdwg.mxu0
    %v708 = vrot.slane %v704, 4
    %v710 = vadd.f32 %v192, %v708
    %v711 = vxor.u32 %v710, 2147483648
    %v712 = vmul.f32 %v711, 1.442695
    %v713 = vpow.pop %v712
    %v714 = vadd.f32 %v713, 1.0
    %v715 = vrcp.pop %v714
    %v716 = vmul.f32 1.0, %v715
    %v717 = vtanh.pop %v710
    %v719 = vrot.slane %v517, 6
    %v721 = vmul.f32 %v716, %v719
    %723 = vrot.lane.b32.xlu0 %v717, 32
    %v724 = vpop.permute.xlu0 %723
    %v726 = vmul.f32 %v716, %v724
    %728 = vrot.lane.b32.xlu0 %v726, 32
    %v729 = vpop.permute.xlu0 %728
    %v731 = vadd.f32 %v721, %v729
    %v732 = vtanh.pop %v731
    %734 = vrot.lane.b32.xlu0 %v732, 32
    %v735 = vpop.permute.xlu0 %734
    %v737 = vmul.f32 %v716, %v735
    %739 = vrot.lane.b32.xlu0 %v737, 64
    %v740 = vpop.permute.xlu0 %739
    %v743 = vrot.slane %v631, 4
    %744 = vrot.lane.b32.xlu0 %v743, 96
    %v745 = vpop.permute.xlu0 %744
    %v747 = vsel %vm213, %v740, %v745
    %v749 = vrot.slane %v747, 4
    %v750 = vsel %vm323, %v749, 0
    %752 = vmatprep.subr.mxu0 0.0
    %753 = vmatpush1.msra.mxu0 %v204
    %754 = vmatprep.subr.mxu0 0.0
    %755 = vmatpush1.msra.mxu0 %v205
    %756 = vmatprep.subr.mxu0 0.0
    %757 = vmatpush1.msra.mxu0 %v206
    %758 = vmatprep.subr.mxu0 0.0
    %759 = vmatpush1.msra.mxu0 %v207
    %760 = vmatprep.subr.mxu0 0.0
    %761 = vmatpush1.msra.mxu0 %v208
    %762 = vmatprep.subr.mxu0 0.0
    %763 = vmatpush1.msra.mxu0 %v209
    %764 = vmatprep.subr.mxu0 0.0
    %765 = vmatpush1.msra.mxu0 %v210
    %766 = vmatprep.subr.mxu0 0.0
    %767 = vmatpush1.msra.mxu0 %v211
    %768 = vmatprep.subr.mxu0 0.0
    %769 = vmatpush1.msra.mxu0 0.0
    %770 = vmatprep.subr.mxu0 0.0
    %771 = vmatpush1.msra.mxu0 0.0
    %772 = vmatprep.subr.mxu0 0.0
    %773 = vmatpush1.msra.mxu0 0.0
    %774 = vmatprep.subr.mxu0 0.0
    %775 = vmatpush1.msra.mxu0 0.0
    %776 = vmatprep.subr.mxu0 0.0
    %777 = vmatpush1.msra.mxu0 0.0
    %778 = vmatprep.subr.mxu0 0.0
    %779 = vmatpush1.msra.mxu0 0.0
    %780 = vmatprep.subr.mxu0 0.0
    %781 = vmatpush1.msra.mxu0 0.0
    %782 = vmatprep.subr.mxu0 0.0
    %783 = vmatpush1.msra.mxu0 0.0
    %784 = vmatprep.subr.mxu0 0.0
    %785 = vmatpush1.msra.mxu0 0.0
    %786 = vmatprep.subr.mxu0 0.0
    %787 = vmatpush1.msra.mxu0 0.0
    %788 = vmatprep.subr.mxu0 0.0
    %789 = vmatpush1.msra.mxu0 0.0
    %790 = vmatprep.subr.mxu0 0.0
    %791 = vmatpush1.msra.mxu0 0.0
    %792 = vmatprep.subr.mxu0 0.0
    %793 = vmatpush1.msra.mxu0 0.0
    %794 = vmatprep.subr.mxu0 0.0
    %795 = vmatpush1.msra.mxu0 0.0
    %796 = vmatprep.subr.mxu0 0.0
    %797 = vmatpush1.msra.mxu0 0.0
    %798 = vmatprep.subr.mxu0 0.0
    %799 = vmatpush1.msra.mxu0 0.0
    %800 = vmatprep.subr.mxu0 0.0
    %801 = vmatpush1.msra.mxu0 0.0
    %802 = vmatprep.subr.mxu0 0.0
    %803 = vmatpush1.msra.mxu0 0.0
    %804 = vmatprep.subr.mxu0 0.0
    %805 = vmatpush1.msra.mxu0 0.0
    %806 = vmatprep.subr.mxu0 0.0
    %807 = vmatpush1.msra.mxu0 0.0
    %808 = vmatprep.subr.mxu0 0.0
    %809 = vmatpush1.msra.mxu0 0.0
    %810 = vmatprep.subr.mxu0 0.0
    %811 = vmatpush1.msra.mxu0 0.0
    %812 = vmatprep.subr.mxu0 0.0
    %813 = vmatpush1.msra.mxu0 0.0
    %814 = vmatprep.subr.mxu0 0.0
    %815 = vmatpush1.msra.mxu0 0.0
    %816 = vmatprep.mubr.f32.mxu0 0.0
    %817 = vmatmul.mubr.f32.gmra.mrb[0].mxu0 %v750
    %v818 = vpop.f32.mrb[0].mxu0
    %v819 = vadd.f32 %v321, %v818
    %v820 = vpop.f32.mrb[0].mxu0
    %821 = vdwg.mxu0
    %v822 = vxor.u32 %v819, 2147483648
    %v823 = vmul.f32 %v822, 1.442695
    %v824 = vpow.pop %v823
    %v825 = vadd.f32 %v824, 1.0
    %v826 = vrcp.pop %v825
    %v827 = vmul.f32 1.0, %v826
    %v828 = vtanh.pop %v819
    %v829 = vmul.f32 %v827, %v625
    %831 = vrot.lane.b32.xlu0 %v828, 32
    %v832 = vpop.permute.xlu0 %831
    %v834 = vmul.f32 %v827, %v832
    %836 = vrot.lane.b32.xlu0 %v834, 32
    %v837 = vpop.permute.xlu0 %836
    %v839 = vadd.f32 %v829, %v837
    %v840 = vtanh.pop %v839
    %842 = vrot.lane.b32.xlu0 %v840, 32
    %v843 = vpop.permute.xlu0 %842
    %v845 = vmul.f32 %v827, %v843
    %v846 = vrot.slane %v737, 4
    %847 = vrot.lane.b32.xlu0 %v846, 64
    %v848 = vpop.permute.xlu0 %847
    %v849 = vsel %vm213, %v848, 0
    %851 = vmatprep.subr.mxu0 0.0
    %852 = vmatpush1.msra.mxu0 %v200
    %853 = vmatprep.subr.mxu0 0.0
    %854 = vmatpush1.msra.mxu0 %v201
    %855 = vmatprep.subr.mxu0 0.0
    %856 = vmatpush1.msra.mxu0 %v202
    %857 = vmatprep.subr.mxu0 0.0
    %858 = vmatpush1.msra.mxu0 %v203
    %859 = vmatprep.subr.mxu0 0.0
    %860 = vmatpush1.msra.mxu0 0.0
    %861 = vmatprep.subr.mxu0 0.0
    %862 = vmatpush1.msra.mxu0 0.0
    %863 = vmatprep.subr.mxu0 0.0
    %864 = vmatpush1.msra.mxu0 0.0
    %865 = vmatprep.subr.mxu0 0.0
    %866 = vmatpush1.msra.mxu0 0.0
    %867 = vmatprep.subr.mxu0 0.0
    %868 = vmatpush1.msra.mxu0 0.0
    %869 = vmatprep.subr.mxu0 0.0
    %870 = vmatpush1.msra.mxu0 0.0
    %871 = vmatprep.subr.mxu0 0.0
    %872 = vmatpush1.msra.mxu0 0.0
    %873 = vmatprep.subr.mxu0 0.0
    %874 = vmatpush1.msra.mxu0 0.0
    %875 = vmatprep.subr.mxu0 0.0
    %876 = vmatpush1.msra.mxu0 0.0
    %877 = vmatprep.subr.mxu0 0.0
    %878 = vmatpush1.msra.mxu0 0.0
    %879 = vmatprep.subr.mxu0 0.0
    %880 = vmatpush1.msra.mxu0 0.0
    %881 = vmatprep.subr.mxu0 0.0
    %882 = vmatpush1.msra.mxu0 0.0
    %883 = vmatprep.subr.mxu0 0.0
    %884 = vmatpush1.msra.mxu0 0.0
    %885 = vmatprep.subr.mxu0 0.0
    %886 = vmatpush1.msra.mxu0 0.0
    %887 = vmatprep.subr.mxu0 0.0
    %888 = vmatpush1.msra.mxu0 0.0
    %889 = vmatprep.subr.mxu0 0.0
    %890 = vmatpush1.msra.mxu0 0.0
    %891 = vmatprep.subr.mxu0 0.0
    %892 = vmatpush1.msra.mxu0 0.0
    %893 = vmatprep.subr.mxu0 0.0
    %894 = vmatpush1.msra.mxu0 0.0
    %895 = vmatprep.subr.mxu0 0.0
    %896 = vmatpush1.msra.mxu0 0.0
    %897 = vmatprep.subr.mxu0 0.0
    %898 = vmatpush1.msra.mxu0 0.0
    %899 = vmatprep.subr.mxu0 0.0
    %900 = vmatpush1.msra.mxu0 0.0
    %901 = vmatprep.subr.mxu0 0.0
    %902 = vmatpush1.msra.mxu0 0.0
    %903 = vmatprep.subr.mxu0 0.0
    %904 = vmatpush1.msra.mxu0 0.0
    %905 = vmatprep.subr.mxu0 0.0
    %906 = vmatpush1.msra.mxu0 0.0
    %907 = vmatprep.subr.mxu0 0.0
    %908 = vmatpush1.msra.mxu0 0.0
    %909 = vmatprep.subr.mxu0 0.0
    %910 = vmatpush1.msra.mxu0 0.0
    %911 = vmatprep.subr.mxu0 0.0
    %912 = vmatpush1.msra.mxu0 0.0
    %913 = vmatprep.subr.mxu0 0.0
    %914 = vmatpush1.msra.mxu0 0.0
    %915 = vmatprep.mubr.f32.mxu0 0.0
    %916 = vmatmul.mubr.f32.gmra.mrb[0].mxu0 %v849
    %v917 = vpop.f32.mrb[0].mxu0
    %v918 = vadd.f32 0.0, %v917
    %v919 = vpop.f32.mrb[0].mxu0
    %920 = vdwg.mxu0
    %v922 = vrot.slane %v918, 2
    %v924 = vadd.f32 %v192, %v922
    %v925 = vxor.u32 %v924, 2147483648
    %v926 = vmul.f32 %v925, 1.442695
    %v927 = vpow.pop %v926
    %v928 = vadd.f32 %v927, 1.0
    %v929 = vrcp.pop %v928
    %v930 = vmul.f32 1.0, %v929
    %v931 = vtanh.pop %v924
    %v933 = vrot.slane %v731, 6
    %v935 = vmul.f32 %v930, %v933
    %937 = vrot.lane.b32.xlu0 %v931, 32
    %v938 = vpop.permute.xlu0 %937
    %v940 = vmul.f32 %v930, %v938
    %942 = vrot.lane.b32.xlu0 %v940, 32
    %v943 = vpop.permute.xlu0 %942
    %v945 = vadd.f32 %v935, %v943
    %v946 = vtanh.pop %v945
    %948 = vrot.lane.b32.xlu0 %v946, 32
    %v949 = vpop.permute.xlu0 %948
    %v951 = vmul.f32 %v930, %v949
    %953 = vrot.lane.b32.xlu0 %v951, 64
    %v954 = vpop.permute.xlu0 %953
    %v957 = vrot.slane %v845, 2
    %958 = vrot.lane.b32.xlu0 %v957, 96
    %v959 = vpop.permute.xlu0 %958
    %v961 = vsel %vm213, %v954, %v959
    %v963 = vrot.slane %v961, 6
    %v964 = vsel %vm323, %v963, 0
    %966 = vmatprep.subr.mxu0 0.0
    %967 = vmatpush1.msra.mxu0 %v204
    %968 = vmatprep.subr.mxu0 0.0
    %969 = vmatpush1.msra.mxu0 %v205
    %970 = vmatprep.subr.mxu0 0.0
    %971 = vmatpush1.msra.mxu0 %v206
    %972 = vmatprep.subr.mxu0 0.0
    %973 = vmatpush1.msra.mxu0 %v207
    %974 = vmatprep.subr.mxu0 0.0
    %975 = vmatpush1.msra.mxu0 %v208
    %976 = vmatprep.subr.mxu0 0.0
    %977 = vmatpush1.msra.mxu0 %v209
    %978 = vmatprep.subr.mxu0 0.0
    %979 = vmatpush1.msra.mxu0 %v210
    %980 = vmatprep.subr.mxu0 0.0
    %981 = vmatpush1.msra.mxu0 %v211
    %982 = vmatprep.subr.mxu0 0.0
    %983 = vmatpush1.msra.mxu0 0.0
    %984 = vmatprep.subr.mxu0 0.0
    %985 = vmatpush1.msra.mxu0 0.0
    %986 = vmatprep.subr.mxu0 0.0
    %987 = vmatpush1.msra.mxu0 0.0
    %988 = vmatprep.subr.mxu0 0.0
    %989 = vmatpush1.msra.mxu0 0.0
    %990 = vmatprep.subr.mxu0 0.0
    %991 = vmatpush1.msra.mxu0 0.0
    %992 = vmatprep.subr.mxu0 0.0
    %993 = vmatpush1.msra.mxu0 0.0
    %994 = vmatprep.subr.mxu0 0.0
    %995 = vmatpush1.msra.mxu0 0.0
    %996 = vmatprep.subr.mxu0 0.0
    %997 = vmatpush1.msra.mxu0 0.0
    %998 = vmatprep.subr.mxu0 0.0
    %999 = vmatpush1.msra.mxu0 0.0
    %1000 = vmatprep.subr.mxu0 0.0
    %1001 = vmatpush1.msra.mxu0 0.0
    %1002 = vmatprep.subr.mxu0 0.0
    %1003 = vmatpush1.msra.mxu0 0.0
    %1004 = vmatprep.subr.mxu0 0.0
    %1005 = vmatpush1.msra.mxu0 0.0
    %1006 = vmatprep.subr.mxu0 0.0
    %1007 = vmatpush1.msra.mxu0 0.0
    %1008 = vmatprep.subr.mxu0 0.0
    %1009 = vmatpush1.msra.mxu0 0.0
    %1010 = vmatprep.subr.mxu0 0.0
    %1011 = vmatpush1.msra.mxu0 0.0
    %1012 = vmatprep.subr.mxu0 0.0
    %1013 = vmatpush1.msra.mxu0 0.0
    %1014 = vmatprep.subr.mxu0 0.0
    %1015 = vmatpush1.msra.mxu0 0.0
    %1016 = vmatprep.subr.mxu0 0.0
    %1017 = vmatpush1.msra.mxu0 0.0
    %1018 = vmatprep.subr.mxu0 0.0
    %1019 = vmatpush1.msra.mxu0 0.0
    %1020 = vmatprep.subr.mxu0 0.0
    %1021 = vmatpush1.msra.mxu0 0.0
    %1022 = vmatprep.subr.mxu0 0.0
    %1023 = vmatpush1.msra.mxu0 0.0
    %1024 = vmatprep.subr.mxu0 0.0
    %1025 = vmatpush1.msra.mxu0 0.0
    %1026 = vmatprep.subr.mxu0 0.0
    %1027 = vmatpush1.msra.mxu0 0.0
    %1028 = vmatprep.subr.mxu0 0.0
    %1029 = vmatpush1.msra.mxu0 0.0
    %1030 = vmatprep.mubr.f32.mxu0 0.0
    %1031 = vmatmul.mubr.f32.gmra.mrb[0].mxu0 %v964
    %v1032 = vpop.f32.mrb[0].mxu0
    %v1033 = vadd.f32 %v321, %v1032
    %v1034 = vpop.f32.mrb[0].mxu0
    %1035 = vdwg.mxu0
    %v1036 = vxor.u32 %v1033, 2147483648
    %v1037 = vmul.f32 %v1036, 1.442695
    %v1038 = vpow.pop %v1037
    %v1039 = vadd.f32 %v1038, 1.0
    %v1040 = vrcp.pop %v1039
    %v1041 = vmul.f32 1.0, %v1040
    %v1042 = vtanh.pop %v1033
    %v1043 = vmul.f32 %v1041, %v839
    %1045 = vrot.lane.b32.xlu0 %v1042, 32
    %v1046 = vpop.permute.xlu0 %1045
    %v1048 = vmul.f32 %v1041, %v1046
    %1050 = vrot.lane.b32.xlu0 %v1048, 32
    %v1051 = vpop.permute.xlu0 %1050
    %v1053 = vadd.f32 %v1043, %v1051
    %v1054 = vtanh.pop %v1053
    %1056 = vrot.lane.b32.xlu0 %v1054, 32
    %v1057 = vpop.permute.xlu0 %1056
    %v1059 = vmul.f32 %v1041, %v1057
    %v1060 = vrot.slane %v951, 6
    %1061 = vrot.lane.b32.xlu0 %v1060, 64
    %v1062 = vpop.permute.xlu0 %1061
    %v1063 = vsel %vm213, %v1062, 0
    %1065 = vmatprep.subr.mxu0 0.0
    %1066 = vmatpush1.msra.mxu0 %v200
    %1067 = vmatprep.subr.mxu0 0.0
    %1068 = vmatpush1.msra.mxu0 %v201
    %1069 = vmatprep.subr.mxu0 0.0
    %1070 = vmatpush1.msra.mxu0 %v202
    %1071 = vmatprep.subr.mxu0 0.0
    %1072 = vmatpush1.msra.mxu0 %v203
    %1073 = vmatprep.subr.mxu0 0.0
    %1074 = vmatpush1.msra.mxu0 0.0
    %1075 = vmatprep.subr.mxu0 0.0
    %1076 = vmatpush1.msra.mxu0 0.0
    %1077 = vmatprep.subr.mxu0 0.0
    %1078 = vmatpush1.msra.mxu0 0.0
    %1079 = vmatprep.subr.mxu0 0.0
    %1080 = vmatpush1.msra.mxu0 0.0
    %1081 = vmatprep.subr.mxu0 0.0
    %1082 = vmatpush1.msra.mxu0 0.0
    %1083 = vmatprep.subr.mxu0 0.0
    %1084 = vmatpush1.msra.mxu0 0.0
    %1085 = vmatprep.subr.mxu0 0.0
    %1086 = vmatpush1.msra.mxu0 0.0
    %1087 = vmatprep.subr.mxu0 0.0
    %1088 = vmatpush1.msra.mxu0 0.0
    %1089 = vmatprep.subr.mxu0 0.0
    %1090 = vmatpush1.msra.mxu0 0.0
    %1091 = vmatprep.subr.mxu0 0.0
    %1092 = vmatpush1.msra.mxu0 0.0
    %1093 = vmatprep.subr.mxu0 0.0
    %1094 = vmatpush1.msra.mxu0 0.0
    %1095 = vmatprep.subr.mxu0 0.0
    %1096 = vmatpush1.msra.mxu0 0.0
    %1097 = vmatprep.subr.mxu0 0.0
    %1098 = vmatpush1.msra.mxu0 0.0
    %1099 = vmatprep.subr.mxu0 0.0
    %1100 = vmatpush1.msra.mxu0 0.0
    %1101 = vmatprep.subr.mxu0 0.0
    %1102 = vmatpush1.msra.mxu0 0.0
    %1103 = vmatprep.subr.mxu0 0.0
    %1104 = vmatpush1.msra.mxu0 0.0
    %1105 = vmatprep.subr.mxu0 0.0
    %1106 = vmatpush1.msra.mxu0 0.0
    %1107 = vmatprep.subr.mxu0 0.0
    %1108 = vmatpush1.msra.mxu0 0.0
    %1109 = vmatprep.subr.mxu0 0.0
    %1110 = vmatpush1.msra.mxu0 0.0
    %1111 = vmatprep.subr.mxu0 0.0
    %1112 = vmatpush1.msra.mxu0 0.0
    %1113 = vmatprep.subr.mxu0 0.0
    %1114 = vmatpush1.msra.mxu0 0.0
    %1115 = vmatprep.subr.mxu0 0.0
    %1116 = vmatpush1.msra.mxu0 0.0
    %1117 = vmatprep.subr.mxu0 0.0
    %1118 = vmatpush1.msra.mxu0 0.0
    %1119 = vmatprep.subr.mxu0 0.0
    %1120 = vmatpush1.msra.mxu0 0.0
    %1121 = vmatprep.subr.mxu0 0.0
    %1122 = vmatpush1.msra.mxu0 0.0
    %1123 = vmatprep.subr.mxu0 0.0
    %1124 = vmatpush1.msra.mxu0 0.0
    %1125 = vmatprep.subr.mxu0 0.0
    %1126 = vmatpush1.msra.mxu0 0.0
    %1127 = vmatprep.subr.mxu0 0.0
    %1128 = vmatpush1.msra.mxu0 0.0
    %1129 = vmatprep.mubr.f32.mxu0 0.0
    %1130 = vmatmul.mubr.f32.gmra.mrb[0].mxu0 %v1063
    %v1131 = vpop.f32.mrb[0].mxu0
    %v1132 = vadd.f32 0.0, %v1131
    %v1133 = vpop.f32.mrb[0].mxu0
    %1134 = vdwg.mxu0
    %v1135 = vadd.f32 %v197, %v1132
    %v1136 = vxor.u32 %v1135, 2147483648
    %v1137 = vmul.f32 %v1136, 1.442695
    %v1138 = vpow.pop %v1137
    %v1139 = vadd.f32 %v1138, 1.0
    %v1140 = vrcp.pop %v1139
    %v1141 = vmul.f32 1.0, %v1140
    %v1142 = vtanh.pop %v1135
    %v1144 = vrot.slane %v945, 6
    %v1146 = vmul.f32 %v1141, %v1144
    %1148 = vrot.lane.b32.xlu0 %v1142, 32
    %v1149 = vpop.permute.xlu0 %1148
    %v1151 = vmul.f32 %v1141, %v1149
    %1153 = vrot.lane.b32.xlu0 %v1151, 32
    %v1154 = vpop.permute.xlu0 %1153
    %v1156 = vadd.f32 %v1146, %v1154
    %v1157 = vtanh.pop %v1156
    %1159 = vrot.lane.b32.xlu0 %v1157, 32
    %v1160 = vpop.permute.xlu0 %1159
    %v1162 = vmul.f32 %v1141, %v1160
    %1164 = vrot.lane.b32.xlu0 %v1162, 64
    %v1165 = vpop.permute.xlu0 %1164
    %1168 = vrot.lane.b32.xlu0 %v1059, 96
    %v1169 = vpop.permute.xlu0 %1168
    %v1171 = vsel %vm213, %v1165, %v1169
    %v1173 = vsel %vm323, %v1171, 0
    %1175 = vmatprep.subr.mxu0 0.0
    %1176 = vmatpush1.msra.mxu0 %v204
    %1177 = vmatprep.subr.mxu0 0.0
    %1178 = vmatpush1.msra.mxu0 %v205
    %1179 = vmatprep.subr.mxu0 0.0
    %1180 = vmatpush1.msra.mxu0 %v206
    %1181 = vmatprep.subr.mxu0 0.0
    %1182 = vmatpush1.msra.mxu0 %v207
    %1183 = vmatprep.subr.mxu0 0.0
    %1184 = vmatpush1.msra.mxu0 %v208
    %1185 = vmatprep.subr.mxu0 0.0
    %1186 = vmatpush1.msra.mxu0 %v209
    %1187 = vmatprep.subr.mxu0 0.0
    %1188 = vmatpush1.msra.mxu0 %v210
    %1189 = vmatprep.subr.mxu0 0.0
    %1190 = vmatpush1.msra.mxu0 %v211
    %1191 = vmatprep.subr.mxu0 0.0
    %1192 = vmatpush1.msra.mxu0 0.0
    %1193 = vmatprep.subr.mxu0 0.0
    %1194 = vmatpush1.msra.mxu0 0.0
    %1195 = vmatprep.subr.mxu0 0.0
    %1196 = vmatpush1.msra.mxu0 0.0
    %1197 = vmatprep.subr.mxu0 0.0
    %1198 = vmatpush1.msra.mxu0 0.0
    %1199 = vmatprep.subr.mxu0 0.0
    %1200 = vmatpush1.msra.mxu0 0.0
    %1201 = vmatprep.subr.mxu0 0.0
    %1202 = vmatpush1.msra.mxu0 0.0
    %1203 = vmatprep.subr.mxu0 0.0
    %1204 = vmatpush1.msra.mxu0 0.0
    %1205 = vmatprep.subr.mxu0 0.0
    %1206 = vmatpush1.msra.mxu0 0.0
    %1207 = vmatprep.subr.mxu0 0.0
    %1208 = vmatpush1.msra.mxu0 0.0
    %1209 = vmatprep.subr.mxu0 0.0
    %1210 = vmatpush1.msra.mxu0 0.0
    %1211 = vmatprep.subr.mxu0 0.0
    %1212 = vmatpush1.msra.mxu0 0.0
    %1213 = vmatprep.subr.mxu0 0.0
    %1214 = vmatpush1.msra.mxu0 0.0
    %1215 = vmatprep.subr.mxu0 0.0
    %1216 = vmatpush1.msra.mxu0 0.0
    %1217 = vmatprep.subr.mxu0 0.0
    %1218 = vmatpush1.msra.mxu0 0.0
    %1219 = vmatprep.subr.mxu0 0.0
    %1220 = vmatpush1.msra.mxu0 0.0
    %1221 = vmatprep.subr.mxu0 0.0
    %1222 = vmatpush1.msra.mxu0 0.0
    %1223 = vmatprep.subr.mxu0 0.0
    %1224 = vmatpush1.msra.mxu0 0.0
    %1225 = vmatprep.subr.mxu0 0.0
    %1226 = vmatpush1.msra.mxu0 0.0
    %1227 = vmatprep.subr.mxu0 0.0
    %1228 = vmatpush1.msra.mxu0 0.0
    %1229 = vmatprep.subr.mxu0 0.0
    %1230 = vmatpush1.msra.mxu0 0.0
    %1231 = vmatprep.subr.mxu0 0.0
    %1232 = vmatpush1.msra.mxu0 0.0
    %1233 = vmatprep.subr.mxu0 0.0
    %1234 = vmatpush1.msra.mxu0 0.0
    %1235 = vmatprep.subr.mxu0 0.0
    %1236 = vmatpush1.msra.mxu0 0.0
    %1237 = vmatprep.subr.mxu0 0.0
    %1238 = vmatpush1.msra.mxu0 0.0
    %1239 = vmatprep.mubr.f32.mxu0 0.0
    %1240 = vmatmul.mubr.f32.gmra.mrb[0].mxu0 %v1173
    %v1241 = vpop.f32.mrb[0].mxu0
    %v1242 = vadd.f32 %v321, %v1241
    %v1243 = vpop.f32.mrb[0].mxu0
    %1244 = vdwg.mxu0
    %v1245 = vxor.u32 %v1242, 2147483648
    %v1246 = vmul.f32 %v1245, 1.442695
    %v1247 = vpow.pop %v1246
    %v1248 = vadd.f32 %v1247, 1.0
    %v1249 = vrcp.pop %v1248
    %v1250 = vmul.f32 1.0, %v1249
    %v1251 = vtanh.pop %v1242
    %v1252 = vmul.f32 %v1250, %v1053
    %1254 = vrot.lane.b32.xlu0 %v1251, 32
    %v1255 = vpop.permute.xlu0 %1254
    %v1257 = vmul.f32 %v1250, %v1255
    %1259 = vrot.lane.b32.xlu0 %v1257, 32
    %v1260 = vpop.permute.xlu0 %1259
    %v1262 = vadd.f32 %v1252, %v1260
    %v1263 = vtanh.pop %v1262
    %1265 = vrot.lane.b32.xlu0 %v1263, 32
    %v1266 = vpop.permute.xlu0 %1265
    %v1268 = vmul.f32 %v1250, %v1266
    %v1269 = vsel %vm213, %v1165, 0
    %1271 = vmatprep.subr.mxu0 0.0
    %1272 = vmatpush1.msra.mxu0 %v200
    %1273 = vmatprep.subr.mxu0 0.0
    %1274 = vmatpush1.msra.mxu0 %v201
    %1275 = vmatprep.subr.mxu0 0.0
    %1276 = vmatpush1.msra.mxu0 %v202
    %1277 = vmatprep.subr.mxu0 0.0
    %1278 = vmatpush1.msra.mxu0 %v203
    %1279 = vmatprep.subr.mxu0 0.0
    %1280 = vmatpush1.msra.mxu0 0.0
    %1281 = vmatprep.subr.mxu0 0.0
    %1282 = vmatpush1.msra.mxu0 0.0
    %1283 = vmatprep.subr.mxu0 0.0
    %1284 = vmatpush1.msra.mxu0 0.0
    %1285 = vmatprep.subr.mxu0 0.0
    %1286 = vmatpush1.msra.mxu0 0.0
    %1287 = vmatprep.subr.mxu0 0.0
    %1288 = vmatpush1.msra.mxu0 0.0
    %1289 = vmatprep.subr.mxu0 0.0
    %1290 = vmatpush1.msra.mxu0 0.0
    %1291 = vmatprep.subr.mxu0 0.0
    %1292 = vmatpush1.msra.mxu0 0.0
    %1293 = vmatprep.subr.mxu0 0.0
    %1294 = vmatpush1.msra.mxu0 0.0
    %1295 = vmatprep.subr.mxu0 0.0
    %1296 = vmatpush1.msra.mxu0 0.0
    %1297 = vmatprep.subr.mxu0 0.0
    %1298 = vmatpush1.msra.mxu0 0.0
    %1299 = vmatprep.subr.mxu0 0.0
    %1300 = vmatpush1.msra.mxu0 0.0
    %1301 = vmatprep.subr.mxu0 0.0
    %1302 = vmatpush1.msra.mxu0 0.0
    %1303 = vmatprep.subr.mxu0 0.0
    %1304 = vmatpush1.msra.mxu0 0.0
    %1305 = vmatprep.subr.mxu0 0.0
    %1306 = vmatpush1.msra.mxu0 0.0
    %1307 = vmatprep.subr.mxu0 0.0
    %1308 = vmatpush1.msra.mxu0 0.0
    %1309 = vmatprep.subr.mxu0 0.0
    %1310 = vmatpush1.msra.mxu0 0.0
    %1311 = vmatprep.subr.mxu0 0.0
    %1312 = vmatpush1.msra.mxu0 0.0
    %1313 = vmatprep.subr.mxu0 0.0
    %1314 = vmatpush1.msra.mxu0 0.0
    %1315 = vmatprep.subr.mxu0 0.0
    %1316 = vmatpush1.msra.mxu0 0.0
    %1317 = vmatprep.subr.mxu0 0.0
    %1318 = vmatpush1.msra.mxu0 0.0
    %1319 = vmatprep.subr.mxu0 0.0
    %1320 = vmatpush1.msra.mxu0 0.0
    %1321 = vmatprep.subr.mxu0 0.0
    %1322 = vmatpush1.msra.mxu0 0.0
    %1323 = vmatprep.subr.mxu0 0.0
    %1324 = vmatpush1.msra.mxu0 0.0
    %1325 = vmatprep.subr.mxu0 0.0
    %1326 = vmatpush1.msra.mxu0 0.0
    %1327 = vmatprep.subr.mxu0 0.0
    %1328 = vmatpush1.msra.mxu0 0.0
    %1329 = vmatprep.subr.mxu0 0.0
    %1330 = vmatpush1.msra.mxu0 0.0
    %1331 = vmatprep.subr.mxu0 0.0
    %1332 = vmatpush1.msra.mxu0 0.0
    %1333 = vmatprep.subr.mxu0 0.0
    %1334 = vmatpush1.msra.mxu0 0.0
    %1335 = vmatprep.mubr.f32.mxu0 0.0
    %1336 = vmatmul.mubr.f32.gmra.mrb[0].mxu0 %v1269
    %v1337 = vpop.f32.mrb[0].mxu0
    %v1338 = vadd.f32 0.0, %v1337
    %v1339 = vpop.f32.mrb[0].mxu0
    %1340 = vdwg.mxu0
    %v1342 = vrot.slane %v1338, 6
    %v1344 = vadd.f32 %v197, %v1342
    %v1345 = vxor.u32 %v1344, 2147483648
    %v1346 = vmul.f32 %v1345, 1.442695
    %v1347 = vpow.pop %v1346
    %v1348 = vadd.f32 %v1347, 1.0
    %v1349 = vrcp.pop %v1348
    %v1350 = vmul.f32 1.0, %v1349
    %v1351 = vtanh.pop %v1344
    %v1353 = vrot.slane %v1156, 6
    %v1355 = vmul.f32 %v1350, %v1353
    %1357 = vrot.lane.b32.xlu0 %v1351, 32
    %v1358 = vpop.permute.xlu0 %1357
    %v1360 = vmul.f32 %v1350, %v1358
    %1362 = vrot.lane.b32.xlu0 %v1360, 32
    %v1363 = vpop.permute.xlu0 %1362
    %v1365 = vadd.f32 %v1355, %v1363
    %v1366 = vtanh.pop %v1365
    %1368 = vrot.lane.b32.xlu0 %v1366, 32
    %v1369 = vpop.permute.xlu0 %1368
    %v1371 = vmul.f32 %v1350, %v1369
    %1373 = vrot.lane.b32.xlu0 %v1371, 64
    %v1374 = vpop.permute.xlu0 %1373
    %v1377 = vrot.slane %v1268, 6
    %1378 = vrot.lane.b32.xlu0 %v1377, 96
    %v1379 = vpop.permute.xlu0 %1378
    %v1381 = vsel %vm213, %v1374, %v1379
    %v1383 = vrot.slane %v1381, 2
    %v1384 = vsel %vm323, %v1383, 0
    %1386 = vmatprep.subr.mxu0 0.0
    %1387 = vmatpush1.msra.mxu0 %v204
    %1388 = vmatprep.subr.mxu0 0.0
    %1389 = vmatpush1.msra.mxu0 %v205
    %1390 = vmatprep.subr.mxu0 0.0
    %1391 = vmatpush1.msra.mxu0 %v206
    %1392 = vmatprep.subr.mxu0 0.0
    %1393 = vmatpush1.msra.mxu0 %v207
    %1394 = vmatprep.subr.mxu0 0.0
    %1395 = vmatpush1.msra.mxu0 %v208
    %1396 = vmatprep.subr.mxu0 0.0
    %1397 = vmatpush1.msra.mxu0 %v209
    %1398 = vmatprep.subr.mxu0 0.0
    %1399 = vmatpush1.msra.mxu0 %v210
    %1400 = vmatprep.subr.mxu0 0.0
    %1401 = vmatpush1.msra.mxu0 %v211
    %1402 = vmatprep.subr.mxu0 0.0
    %1403 = vmatpush1.msra.mxu0 0.0
    %1404 = vmatprep.subr.mxu0 0.0
    %1405 = vmatpush1.msra.mxu0 0.0
    %1406 = vmatprep.subr.mxu0 0.0
    %1407 = vmatpush1.msra.mxu0 0.0
    %1408 = vmatprep.subr.mxu0 0.0
    %1409 = vmatpush1.msra.mxu0 0.0
    %1410 = vmatprep.subr.mxu0 0.0
    %1411 = vmatpush1.msra.mxu0 0.0
    %1412 = vmatprep.subr.mxu0 0.0
    %1413 = vmatpush1.msra.mxu0 0.0
    %1414 = vmatprep.subr.mxu0 0.0
    %1415 = vmatpush1.msra.mxu0 0.0
    %1416 = vmatprep.subr.mxu0 0.0
    %1417 = vmatpush1.msra.mxu0 0.0
    %1418 = vmatprep.subr.mxu0 0.0
    %1419 = vmatpush1.msra.mxu0 0.0
    %1420 = vmatprep.subr.mxu0 0.0
    %1421 = vmatpush1.msra.mxu0 0.0
    %1422 = vmatprep.subr.mxu0 0.0
    %1423 = vmatpush1.msra.mxu0 0.0
    %1424 = vmatprep.subr.mxu0 0.0
    %1425 = vmatpush1.msra.mxu0 0.0
    %1426 = vmatprep.subr.mxu0 0.0
    %1427 = vmatpush1.msra.mxu0 0.0
    %1428 = vmatprep.subr.mxu0 0.0
    %1429 = vmatpush1.msra.mxu0 0.0
    %1430 = vmatprep.subr.mxu0 0.0
    %1431 = vmatpush1.msra.mxu0 0.0
    %1432 = vmatprep.subr.mxu0 0.0
    %1433 = vmatpush1.msra.mxu0 0.0
    %1434 = vmatprep.subr.mxu0 0.0
    %1435 = vmatpush1.msra.mxu0 0.0
    %1436 = vmatprep.subr.mxu0 0.0
    %1437 = vmatpush1.msra.mxu0 0.0
    %1438 = vmatprep.subr.mxu0 0.0
    %1439 = vmatpush1.msra.mxu0 0.0
    %1440 = vmatprep.subr.mxu0 0.0
    %1441 = vmatpush1.msra.mxu0 0.0
    %1442 = vmatprep.subr.mxu0 0.0
    %1443 = vmatpush1.msra.mxu0 0.0
    %1444 = vmatprep.subr.mxu0 0.0
    %1445 = vmatpush1.msra.mxu0 0.0
    %1446 = vmatprep.subr.mxu0 0.0
    %1447 = vmatpush1.msra.mxu0 0.0
    %1448 = vmatprep.subr.mxu0 0.0
    %1449 = vmatpush1.msra.mxu0 0.0
    %1450 = vmatprep.mubr.f32.mxu0 0.0
    %1451 = vmatmul.mubr.f32.gmra.mrb[0].mxu0 %v1384
    %v1452 = vpop.f32.mrb[0].mxu0
    %v1453 = vadd.f32 %v321, %v1452
    %v1454 = vpop.f32.mrb[0].mxu0
    %1455 = vdwg.mxu0
    %v1456 = vxor.u32 %v1453, 2147483648
    %v1457 = vmul.f32 %v1456, 1.442695
    %v1458 = vpow.pop %v1457
    %v1459 = vadd.f32 %v1458, 1.0
    %v1460 = vrcp.pop %v1459
    %v1461 = vmul.f32 1.0, %v1460
    %v1462 = vtanh.pop %v1453
    %v1463 = vmul.f32 %v1461, %v1262
    %1465 = vrot.lane.b32.xlu0 %v1462, 32
    %v1466 = vpop.permute.xlu0 %1465
    %v1468 = vmul.f32 %v1461, %v1466
    %1470 = vrot.lane.b32.xlu0 %v1468, 32
    %v1471 = vpop.permute.xlu0 %1470
    %v1473 = vadd.f32 %v1463, %v1471
    %v1474 = vtanh.pop %v1473
    %1476 = vrot.lane.b32.xlu0 %v1474, 32
    %v1477 = vpop.permute.xlu0 %1476
    %v1479 = vmul.f32 %v1461, %v1477
    %v1480 = vrot.slane %v1371, 2
    %1481 = vrot.lane.b32.xlu0 %v1480, 64
    %v1482 = vpop.permute.xlu0 %1481
    %v1483 = vsel %vm213, %v1482, 0
    %1485 = vmatprep.subr.mxu0 0.0
    %1486 = vmatpush1.msra.mxu0 %v200
    %1487 = vmatprep.subr.mxu0 0.0
    %1488 = vmatpush1.msra.mxu0 %v201
    %1489 = vmatprep.subr.mxu0 0.0
    %1490 = vmatpush1.msra.mxu0 %v202
    %1491 = vmatprep.subr.mxu0 0.0
    %1492 = vmatpush1.msra.mxu0 %v203
    %1493 = vmatprep.subr.mxu0 0.0
    %1494 = vmatpush1.msra.mxu0 0.0
    %1495 = vmatprep.subr.mxu0 0.0
    %1496 = vmatpush1.msra.mxu0 0.0
    %1497 = vmatprep.subr.mxu0 0.0
    %1498 = vmatpush1.msra.mxu0 0.0
    %1499 = vmatprep.subr.mxu0 0.0
    %1500 = vmatpush1.msra.mxu0 0.0
    %1501 = vmatprep.subr.mxu0 0.0
    %1502 = vmatpush1.msra.mxu0 0.0
    %1503 = vmatprep.subr.mxu0 0.0
    %1504 = vmatpush1.msra.mxu0 0.0
    %1505 = vmatprep.subr.mxu0 0.0
    %1506 = vmatpush1.msra.mxu0 0.0
    %1507 = vmatprep.subr.mxu0 0.0
    %1508 = vmatpush1.msra.mxu0 0.0
    %1509 = vmatprep.subr.mxu0 0.0
    %1510 = vmatpush1.msra.mxu0 0.0
    %1511 = vmatprep.subr.mxu0 0.0
    %1512 = vmatpush1.msra.mxu0 0.0
    %1513 = vmatprep.subr.mxu0 0.0
    %1514 = vmatpush1.msra.mxu0 0.0
    %1515 = vmatprep.subr.mxu0 0.0
    %1516 = vmatpush1.msra.mxu0 0.0
    %1517 = vmatprep.subr.mxu0 0.0
    %1518 = vmatpush1.msra.mxu0 0.0
    %1519 = vmatprep.subr.mxu0 0.0
    %1520 = vmatpush1.msra.mxu0 0.0
    %1521 = vmatprep.subr.mxu0 0.0
    %1522 = vmatpush1.msra.mxu0 0.0
    %1523 = vmatprep.subr.mxu0 0.0
    %1524 = vmatpush1.msra.mxu0 0.0
    %1525 = vmatprep.subr.mxu0 0.0
    %1526 = vmatpush1.msra.mxu0 0.0
    %1527 = vmatprep.subr.mxu0 0.0
    %1528 = vmatpush1.msra.mxu0 0.0
    %1529 = vmatprep.subr.mxu0 0.0
    %1530 = vmatpush1.msra.mxu0 0.0
    %1531 = vmatprep.subr.mxu0 0.0
    %1532 = vmatpush1.msra.mxu0 0.0
    %1533 = vmatprep.subr.mxu0 0.0
    %1534 = vmatpush1.msra.mxu0 0.0
    %1535 = vmatprep.subr.mxu0 0.0
    %1536 = vmatpush1.msra.mxu0 0.0
    %1537 = vmatprep.subr.mxu0 0.0
    %1538 = vmatpush1.msra.mxu0 0.0
    %1539 = vmatprep.subr.mxu0 0.0
    %1540 = vmatpush1.msra.mxu0 0.0
    %1541 = vmatprep.subr.mxu0 0.0
    %1542 = vmatpush1.msra.mxu0 0.0
    %1543 = vmatprep.subr.mxu0 0.0
    %1544 = vmatpush1.msra.mxu0 0.0
    %1545 = vmatprep.subr.mxu0 0.0
    %1546 = vmatpush1.msra.mxu0 0.0
    %1547 = vmatprep.subr.mxu0 0.0
    %1548 = vmatpush1.msra.mxu0 0.0
    %1549 = vmatprep.mubr.f32.mxu0 0.0
    %1550 = vmatmul.mubr.f32.gmra.mrb[0].mxu0 %v1483
    %v1551 = vpop.f32.mrb[0].mxu0
    %v1552 = vadd.f32 0.0, %v1551
    %v1553 = vpop.f32.mrb[0].mxu0
    %1554 = vdwg.mxu0
    %v1556 = vrot.slane %v1552, 4
    %v1558 = vadd.f32 %v197, %v1556
    %v1559 = vxor.u32 %v1558, 2147483648
    %v1560 = vmul.f32 %v1559, 1.442695
    %v1561 = vpow.pop %v1560
    %v1562 = vadd.f32 %v1561, 1.0
    %v1563 = vrcp.pop %v1562
    %v1564 = vmul.f32 1.0, %v1563
    %v1565 = vtanh.pop %v1558
    %v1567 = vrot.slane %v1365, 6
    %v1569 = vmul.f32 %v1564, %v1567
    %1571 = vrot.lane.b32.xlu0 %v1565, 32
    %v1572 = vpop.permute.xlu0 %1571
    %v1574 = vmul.f32 %v1564, %v1572
    %1576 = vrot.lane.b32.xlu0 %v1574, 32
    %v1577 = vpop.permute.xlu0 %1576
    %v1579 = vadd.f32 %v1569, %v1577
    %v1580 = vtanh.pop %v1579
    %1582 = vrot.lane.b32.xlu0 %v1580, 32
    %v1583 = vpop.permute.xlu0 %1582
    %v1585 = vmul.f32 %v1564, %v1583
    %1587 = vrot.lane.b32.xlu0 %v1585, 64
    %v1588 = vpop.permute.xlu0 %1587
    %v1591 = vrot.slane %v1479, 4
    %1592 = vrot.lane.b32.xlu0 %v1591, 96
    %v1593 = vpop.permute.xlu0 %1592
    %v1595 = vsel %vm213, %v1588, %v1593
    %v1597 = vrot.slane %v1595, 4
    %v1598 = vsel %vm323, %v1597, 0
    %1600 = vmatprep.subr.mxu0 0.0
    %1601 = vmatpush1.msra.mxu0 %v204
    %1602 = vmatprep.subr.mxu0 0.0
    %1603 = vmatpush1.msra.mxu0 %v205
    %1604 = vmatprep.subr.mxu0 0.0
    %1605 = vmatpush1.msra.mxu0 %v206
    %1606 = vmatprep.subr.mxu0 0.0
    %1607 = vmatpush1.msra.mxu0 %v207
    %1608 = vmatprep.subr.mxu0 0.0
    %1609 = vmatpush1.msra.mxu0 %v208
    %1610 = vmatprep.subr.mxu0 0.0
    %1611 = vmatpush1.msra.mxu0 %v209
    %1612 = vmatprep.subr.mxu0 0.0
    %1613 = vmatpush1.msra.mxu0 %v210
    %1614 = vmatprep.subr.mxu0 0.0
    %1615 = vmatpush1.msra.mxu0 %v211
    %1616 = vmatprep.subr.mxu0 0.0
    %1617 = vmatpush1.msra.mxu0 0.0
    %1618 = vmatprep.subr.mxu0 0.0
    %1619 = vmatpush1.msra.mxu0 0.0
    %1620 = vmatprep.subr.mxu0 0.0
    %1621 = vmatpush1.msra.mxu0 0.0
    %1622 = vmatprep.subr.mxu0 0.0
    %1623 = vmatpush1.msra.mxu0 0.0
    %1624 = vmatprep.subr.mxu0 0.0
    %1625 = vmatpush1.msra.mxu0 0.0
    %1626 = vmatprep.subr.mxu0 0.0
    %1627 = vmatpush1.msra.mxu0 0.0
    %1628 = vmatprep.subr.mxu0 0.0
    %1629 = vmatpush1.msra.mxu0 0.0
    %1630 = vmatprep.subr.mxu0 0.0
    %1631 = vmatpush1.msra.mxu0 0.0
    %1632 = vmatprep.subr.mxu0 0.0
    %1633 = vmatpush1.msra.mxu0 0.0
    %1634 = vmatprep.subr.mxu0 0.0
    %1635 = vmatpush1.msra.mxu0 0.0
    %1636 = vmatprep.subr.mxu0 0.0
    %1637 = vmatpush1.msra.mxu0 0.0
    %1638 = vmatprep.subr.mxu0 0.0
    %1639 = vmatpush1.msra.mxu0 0.0
    %1640 = vmatprep.subr.mxu0 0.0
    %1641 = vmatpush1.msra.mxu0 0.0
    %1642 = vmatprep.subr.mxu0 0.0
    %1643 = vmatpush1.msra.mxu0 0.0
    %1644 = vmatprep.subr.mxu0 0.0
    %1645 = vmatpush1.msra.mxu0 0.0
    %1646 = vmatprep.subr.mxu0 0.0
    %1647 = vmatpush1.msra.mxu0 0.0
    %1648 = vmatprep.subr.mxu0 0.0
    %1649 = vmatpush1.msra.mxu0 0.0
    %1650 = vmatprep.subr.mxu0 0.0
    %1651 = vmatpush1.msra.mxu0 0.0
    %1652 = vmatprep.subr.mxu0 0.0
    %1653 = vmatpush1.msra.mxu0 0.0
    %1654 = vmatprep.subr.mxu0 0.0
    %1655 = vmatpush1.msra.mxu0 0.0
    %1656 = vmatprep.subr.mxu0 0.0
    %1657 = vmatpush1.msra.mxu0 0.0
    %1658 = vmatprep.subr.mxu0 0.0
    %1659 = vmatpush1.msra.mxu0 0.0
    %1660 = vmatprep.subr.mxu0 0.0
    %1661 = vmatpush1.msra.mxu0 0.0
    %1662 = vmatprep.subr.mxu0 0.0
    %1663 = vmatpush1.msra.mxu0 0.0
    %1664 = vmatprep.mubr.f32.mxu0 0.0
    %1665 = vmatmul.mubr.f32.gmra.mrb[0].mxu0 %v1598
    %v1666 = vpop.f32.mrb[0].mxu0
    %v1667 = vadd.f32 %v321, %v1666
    %v1668 = vpop.f32.mrb[0].mxu0
    %1669 = vdwg.mxu0
    %v1670 = vxor.u32 %v1667, 2147483648
    %v1671 = vmul.f32 %v1670, 1.442695
    %v1672 = vpow.pop %v1671
    %v1673 = vadd.f32 %v1672, 1.0
    %v1674 = vrcp.pop %v1673
    %v1675 = vmul.f32 1.0, %v1674
    %v1676 = vtanh.pop %v1667
    %v1677 = vmul.f32 %v1675, %v1473
    %1679 = vrot.lane.b32.xlu0 %v1676, 32
    %v1680 = vpop.permute.xlu0 %1679
    %v1682 = vmul.f32 %v1675, %v1680
    %1684 = vrot.lane.b32.xlu0 %v1682, 32
    %v1685 = vpop.permute.xlu0 %1684
    %v1687 = vadd.f32 %v1677, %v1685
    %v1688 = vtanh.pop %v1687
    %1690 = vrot.lane.b32.xlu0 %v1688, 32
    %v1691 = vpop.permute.xlu0 %1690
    %v1693 = vmul.f32 %v1675, %v1691
    %v1694 = vrot.slane %v1585, 4
    %1695 = vrot.lane.b32.xlu0 %v1694, 64
    %v1696 = vpop.permute.xlu0 %1695
    %v1697 = vsel %vm213, %v1696, 0
    %1699 = vmatprep.subr.mxu0 0.0
    %1700 = vmatpush1.msra.mxu0 %v200
    %1701 = vmatprep.subr.mxu0 0.0
    %1702 = vmatpush1.msra.mxu0 %v201
    %1703 = vmatprep.subr.mxu0 0.0
    %1704 = vmatpush1.msra.mxu0 %v202
    %1705 = vmatprep.subr.mxu0 0.0
    %1706 = vmatpush1.msra.mxu0 %v203
    %1707 = vmatprep.subr.mxu0 0.0
    %1708 = vmatpush1.msra.mxu0 0.0
    %1709 = vmatprep.subr.mxu0 0.0
    %1710 = vmatpush1.msra.mxu0 0.0
    %1711 = vmatprep.subr.mxu0 0.0
    %1712 = vmatpush1.msra.mxu0 0.0
    %1713 = vmatprep.subr.mxu0 0.0
    %1714 = vmatpush1.msra.mxu0 0.0
    %1715 = vmatprep.subr.mxu0 0.0
    %1716 = vmatpush1.msra.mxu0 0.0
    %1717 = vmatprep.subr.mxu0 0.0
    %1718 = vmatpush1.msra.mxu0 0.0
    %1719 = vmatprep.subr.mxu0 0.0
    %1720 = vmatpush1.msra.mxu0 0.0
    %1721 = vmatprep.subr.mxu0 0.0
    %1722 = vmatpush1.msra.mxu0 0.0
    %1723 = vmatprep.subr.mxu0 0.0
    %1724 = vmatpush1.msra.mxu0 0.0
    %1725 = vmatprep.subr.mxu0 0.0
    %1726 = vmatpush1.msra.mxu0 0.0
    %1727 = vmatprep.subr.mxu0 0.0
    %1728 = vmatpush1.msra.mxu0 0.0
    %1729 = vmatprep.subr.mxu0 0.0
    %1730 = vmatpush1.msra.mxu0 0.0
    %1731 = vmatprep.subr.mxu0 0.0
    %1732 = vmatpush1.msra.mxu0 0.0
    %1733 = vmatprep.subr.mxu0 0.0
    %1734 = vmatpush1.msra.mxu0 0.0
    %1735 = vmatprep.subr.mxu0 0.0
    %1736 = vmatpush1.msra.mxu0 0.0
    %1737 = vmatprep.subr.mxu0 0.0
    %1738 = vmatpush1.msra.mxu0 0.0
    %1739 = vmatprep.subr.mxu0 0.0
    %1740 = vmatpush1.msra.mxu0 0.0
    %1741 = vmatprep.subr.mxu0 0.0
    %1742 = vmatpush1.msra.mxu0 0.0
    %1743 = vmatprep.subr.mxu0 0.0
    %1744 = vmatpush1.msra.mxu0 0.0
    %1745 = vmatprep.subr.mxu0 0.0
    %1746 = vmatpush1.msra.mxu0 0.0
    %1747 = vmatprep.subr.mxu0 0.0
    %1748 = vmatpush1.msra.mxu0 0.0
    %1749 = vmatprep.subr.mxu0 0.0
    %1750 = vmatpush1.msra.mxu0 0.0
    %1751 = vmatprep.subr.mxu0 0.0
    %1752 = vmatpush1.msra.mxu0 0.0
    %1753 = vmatprep.subr.mxu0 0.0
    %1754 = vmatpush1.msra.mxu0 0.0
    %1755 = vmatprep.subr.mxu0 0.0
    %1756 = vmatpush1.msra.mxu0 0.0
    %1757 = vmatprep.subr.mxu0 0.0
    %1758 = vmatpush1.msra.mxu0 0.0
    %1759 = vmatprep.subr.mxu0 0.0
    %1760 = vmatpush1.msra.mxu0 0.0
    %1761 = vmatprep.subr.mxu0 0.0
    %1762 = vmatpush1.msra.mxu0 0.0
    %1763 = vmatprep.mubr.f32.mxu0 0.0
    %1764 = vmatmul.mubr.f32.gmra.mrb[0].mxu0 %v1697
    %v1765 = vpop.f32.mrb[0].mxu0
    %v1766 = vadd.f32 0.0, %v1765
    %v1767 = vpop.f32.mrb[0].mxu0
    %1768 = vdwg.mxu0
    %v1770 = vrot.slane %v1766, 2
    %v1772 = vadd.f32 %v197, %v1770
    %v1773 = vxor.u32 %v1772, 2147483648
    %v1774 = vmul.f32 %v1773, 1.442695
    %v1775 = vpow.pop %v1774
    %v1776 = vadd.f32 %v1775, 1.0
    %v1777 = vrcp.pop %v1776
    %v1778 = vmul.f32 1.0, %v1777
    %v1779 = vtanh.pop %v1772
    %v1781 = vrot.slane %v1579, 6
    %v1783 = vmul.f32 %v1778, %v1781
    %1785 = vrot.lane.b32.xlu0 %v1779, 32
    %v1786 = vpop.permute.xlu0 %1785
    %v1788 = vmul.f32 %v1778, %v1786
    %1790 = vrot.lane.b32.xlu0 %v1788, 32
    %v1791 = vpop.permute.xlu0 %1790
    %v1793 = vadd.f32 %v1783, %v1791
    %v1794 = vtanh.pop %v1793
    %1796 = vrot.lane.b32.xlu0 %v1794, 32
    %v1797 = vpop.permute.xlu0 %1796
    %v1799 = vmul.f32 %v1778, %v1797
    %1801 = vrot.lane.b32.xlu0 %v1799, 64
    %v1802 = vpop.permute.xlu0 %1801
    %v1805 = vrot.slane %v1693, 2
    %1806 = vrot.lane.b32.xlu0 %v1805, 96
    %v1807 = vpop.permute.xlu0 %1806
    %v1809 = vsel %vm213, %v1802, %v1807
    %v1811 = vrot.slane %v1809, 6
    %v1812 = vsel %vm323, %v1811, 0
    %1814 = vmatprep.subr.mxu0 0.0
    %1815 = vmatpush1.msra.mxu0 %v204
    %1816 = vmatprep.subr.mxu0 0.0
    %1817 = vmatpush1.msra.mxu0 %v205
    %1818 = vmatprep.subr.mxu0 0.0
    %1819 = vmatpush1.msra.mxu0 %v206
    %1820 = vmatprep.subr.mxu0 0.0
    %1821 = vmatpush1.msra.mxu0 %v207
    %1822 = vmatprep.subr.mxu0 0.0
    %1823 = vmatpush1.msra.mxu0 %v208
    %1824 = vmatprep.subr.mxu0 0.0
    %1825 = vmatpush1.msra.mxu0 %v209
    %1826 = vmatprep.subr.mxu0 0.0
    %1827 = vmatpush1.msra.mxu0 %v210
    %1828 = vmatprep.subr.mxu0 0.0
    %1829 = vmatpush1.msra.mxu0 %v211
    %1830 = vmatprep.subr.mxu0 0.0
    %1831 = vmatpush1.msra.mxu0 0.0
    %1832 = vmatprep.subr.mxu0 0.0
    %1833 = vmatpush1.msra.mxu0 0.0
    %1834 = vmatprep.subr.mxu0 0.0
    %1835 = vmatpush1.msra.mxu0 0.0
    %1836 = vmatprep.subr.mxu0 0.0
    %1837 = vmatpush1.msra.mxu0 0.0
    %1838 = vmatprep.subr.mxu0 0.0
    %1839 = vmatpush1.msra.mxu0 0.0
    %1840 = vmatprep.subr.mxu0 0.0
    %1841 = vmatpush1.msra.mxu0 0.0
    %1842 = vmatprep.subr.mxu0 0.0
    %1843 = vmatpush1.msra.mxu0 0.0
    %1844 = vmatprep.subr.mxu0 0.0
    %1845 = vmatpush1.msra.mxu0 0.0
    %1846 = vmatprep.subr.mxu0 0.0
    %1847 = vmatpush1.msra.mxu0 0.0
    %1848 = vmatprep.subr.mxu0 0.0
    %1849 = vmatpush1.msra.mxu0 0.0
    %1850 = vmatprep.subr.mxu0 0.0
    %1851 = vmatpush1.msra.mxu0 0.0
    %1852 = vmatprep.subr.mxu0 0.0
    %1853 = vmatpush1.msra.mxu0 0.0
    %1854 = vmatprep.subr.mxu0 0.0
    %1855 = vmatpush1.msra.mxu0 0.0
    %1856 = vmatprep.subr.mxu0 0.0
    %1857 = vmatpush1.msra.mxu0 0.0
    %1858 = vmatprep.subr.mxu0 0.0
    %1859 = vmatpush1.msra.mxu0 0.0
    %1860 = vmatprep.subr.mxu0 0.0
    %1861 = vmatpush1.msra.mxu0 0.0
    %1862 = vmatprep.subr.mxu0 0.0
    %1863 = vmatpush1.msra.mxu0 0.0
    %1864 = vmatprep.subr.mxu0 0.0
    %1865 = vmatpush1.msra.mxu0 0.0
    %1866 = vmatprep.subr.mxu0 0.0
    %1867 = vmatpush1.msra.mxu0 0.0
    %1868 = vmatprep.subr.mxu0 0.0
    %1869 = vmatpush1.msra.mxu0 0.0
    %1870 = vmatprep.subr.mxu0 0.0
    %1871 = vmatpush1.msra.mxu0 0.0
    %1872 = vmatprep.subr.mxu0 0.0
    %1873 = vmatpush1.msra.mxu0 0.0
    %1874 = vmatprep.subr.mxu0 0.0
    %1875 = vmatpush1.msra.mxu0 0.0
    %1876 = vmatprep.subr.mxu0 0.0
    %1877 = vmatpush1.msra.mxu0 0.0
    %1878 = vmatprep.mubr.f32.mxu0 0.0
    %1879 = vmatmul.mubr.f32.gmra.mrb[0].mxu0 %v1812
    %v1880 = vpop.f32.mrb[0].mxu0
    %v1881 = vadd.f32 %v321, %v1880
    %v1882 = vpop.f32.mrb[0].mxu0
    %1883 = vdwg.mxu0
    %v1884 = vxor.u32 %v1881, 2147483648
    %v1885 = vmul.f32 %v1884, 1.442695
    %v1886 = vpow.pop %v1885
    %v1887 = vadd.f32 %v1886, 1.0
    %v1888 = vrcp.pop %v1887
    %v1889 = vmul.f32 1.0, %v1888
    %v1890 = vtanh.pop %v1881
    %v1891 = vmul.f32 %v1889, %v1687
    %1893 = vrot.lane.b32.xlu0 %v1890, 32
    %v1894 = vpop.permute.xlu0 %1893
    %v1896 = vmul.f32 %v1889, %v1894
    %1898 = vrot.lane.b32.xlu0 %v1896, 32
    %v1899 = vpop.permute.xlu0 %1898
    %v1901 = vadd.f32 %v1891, %v1899
    %v1902 = vtanh.pop %v1901
    %1904 = vrot.lane.b32.xlu0 %v1902, 32
    %v1905 = vpop.permute.xlu0 %1904
    %v1907 = vmul.f32 %v1889, %v1905
    %v1908 = vld [vmem:[#allocation10] sm:$0xff]
    %v1909 = vld [vmem:[#allocation10 + $0x8] sm:$0xff]
    %v1910 = vld [vmem:[#allocation10 + $0x10] sm:$0xff]
    %v1911 = vld [vmem:[#allocation10 + $0x18] sm:$0xff]
    %v1912 = vld [vmem:[%s7] sm:$0x1]
    %v1914 = vlaneseq
    %v1915 = vshrl.u32 %v1914, 7
    %v1916 = vsub.s32 0, %v1915
    %v1917 = vrot.slane %v1912, %v1916
    %1920 = vrot.lane.b32.xlu0 %v1907, 64
    %v1921 = vpop.permute.xlu0 %1920
    %v1922 = vsel %vm213, %v1921, 0
    %1924 = vmatprep.subr.mxu0 0.0
    %1925 = vmatpush1.msra.mxu0 %v1908
    %1926 = vmatprep.subr.mxu0 0.0
    %1927 = vmatpush1.msra.mxu0 %v1909
    %1928 = vmatprep.subr.mxu0 0.0
    %1929 = vmatpush1.msra.mxu0 %v1910
    %1930 = vmatprep.subr.mxu0 0.0
    %1931 = vmatpush1.msra.mxu0 %v1911
    %1932 = vmatprep.subr.mxu0 0.0
    %1933 = vmatpush1.msra.mxu0 0.0
    %1934 = vmatprep.subr.mxu0 0.0
    %1935 = vmatpush1.msra.mxu0 0.0
    %1936 = vmatprep.subr.mxu0 0.0
    %1937 = vmatpush1.msra.mxu0 0.0
    %1938 = vmatprep.subr.mxu0 0.0
    %1939 = vmatpush1.msra.mxu0 0.0
    %1940 = vmatprep.subr.mxu0 0.0
    %1941 = vmatpush1.msra.mxu0 0.0
    %1942 = vmatprep.subr.mxu0 0.0
    %1943 = vmatpush1.msra.mxu0 0.0
    %1944 = vmatprep.subr.mxu0 0.0
    %1945 = vmatpush1.msra.mxu0 0.0
    %1946 = vmatprep.subr.mxu0 0.0
    %1947 = vmatpush1.msra.mxu0 0.0
    %1948 = vmatprep.subr.mxu0 0.0
    %1949 = vmatpush1.msra.mxu0 0.0
    %1950 = vmatprep.subr.mxu0 0.0
    %1951 = vmatpush1.msra.mxu0 0.0
    %1952 = vmatprep.subr.mxu0 0.0
    %1953 = vmatpush1.msra.mxu0 0.0
    %1954 = vmatprep.subr.mxu0 0.0
    %1955 = vmatpush1.msra.mxu0 0.0
    %1956 = vmatprep.subr.mxu0 0.0
    %1957 = vmatpush1.msra.mxu0 0.0
    %1958 = vmatprep.subr.mxu0 0.0
    %1959 = vmatpush1.msra.mxu0 0.0
    %1960 = vmatprep.subr.mxu0 0.0
    %1961 = vmatpush1.msra.mxu0 0.0
    %1962 = vmatprep.subr.mxu0 0.0
    %1963 = vmatpush1.msra.mxu0 0.0
    %1964 = vmatprep.subr.mxu0 0.0
    %1965 = vmatpush1.msra.mxu0 0.0
    %1966 = vmatprep.subr.mxu0 0.0
    %1967 = vmatpush1.msra.mxu0 0.0
    %1968 = vmatprep.subr.mxu0 0.0
    %1969 = vmatpush1.msra.mxu0 0.0
    %1970 = vmatprep.subr.mxu0 0.0
    %1971 = vmatpush1.msra.mxu0 0.0
    %1972 = vmatprep.subr.mxu0 0.0
    %1973 = vmatpush1.msra.mxu0 0.0
    %1974 = vmatprep.subr.mxu0 0.0
    %1975 = vmatpush1.msra.mxu0 0.0
    %1976 = vmatprep.subr.mxu0 0.0
    %1977 = vmatpush1.msra.mxu0 0.0
    %1978 = vmatprep.subr.mxu0 0.0
    %1979 = vmatpush1.msra.mxu0 0.0
    %1980 = vmatprep.subr.mxu0 0.0
    %1981 = vmatpush1.msra.mxu0 0.0
    %1982 = vmatprep.subr.mxu0 0.0
    %1983 = vmatpush1.msra.mxu0 0.0
    %1984 = vmatprep.subr.mxu0 0.0
    %1985 = vmatpush1.msra.mxu0 0.0
    %1986 = vmatprep.subr.mxu0 0.0
    %1987 = vmatpush1.msra.mxu0 0.0
    %1988 = vmatprep.mubr.f32.mxu0 0.0
    %1989 = vmatmul.mubr.f32.gmra.mrb[0].mxu0 %v1922
    %v1990 = vpop.f32.mrb[0].mxu0
    %v1991 = vadd.f32 %v1917, %v1990
    %v1992 = vpop.f32.mrb[0].mxu0
    %1993 = vdwg.mxu0
    %1994 = vst [vmem:[#allocation11] sm:$0x3] %v1991
    // Predicated region
    $region54: #{tpu_custom_call.1} parent=1 // pred_check
      _
    $region55: #{tpu_custom_call.1} parent=1 // pred_check_branch
      %1996 = sbr.rel (0) target = $region57
    $region56: #{tpu_custom_call.1} parent=1 // pred_region
      %s1998 = ssub.s32 32, 32
      %1999 = vsyncadd [#allocation4], %s1998
      %s2001 = sshll.u32 [#allocation11], 4
      %s2002 = int_to_ptr.vmem [resolvable:$true] %s2001
      %2004 = dma.vmem_to_hbm [thread:$0]  %s2002, 32, %s8, [#allocation4]
    $region57: #{tpu_custom_call.1} parent=1 // pred_fallthru
      _
    // Predicated region
    $region58: #{tpu_custom_call.1} parent=1 // pred_check
      _
    $region59: #{tpu_custom_call.1} parent=1 // pred_check_branch
      %2006 = sbr.rel (0) target = $region61
    $region60: #{tpu_custom_call.1} parent=1 // pred_region
      %2007 = dma.done [#allocation4], 32
    $region61: #{tpu_custom_call.1} parent=1 // pred_fallthru
      _
    %2008 = vsyncpa [#allocation3], 1
    %2009 = vsyncpa [#allocation6], 1
    %2010 = vsyncpa [#allocation9], 1
    %2011 = vsyncpa [#allocation4], 1

</llo_original>
